<compile_context>
chip_gen: v5e
topology: v5e:2x2
jax: 0.10.0
libtpu: 0.0.40
codegen_flags: <defaults>
</compile_context>

<pallas_src>
import math

import jax
import jax.numpy as jnp
from jax.experimental import pallas as pl
from jax.experimental.pallas import tpu as pltpu

NUM_CLASSES = 23
N_PAD = 128        # lane-dense padded output width for the fused LN+fc kernel
EPS = 1e-6
B_TILE = 16        # batch tile (multiple of 16 -> unmasked tiles for f32 and bf16)
UNROLL_T = 16      # fully unroll the time loop up to this length; fori_loop beyond


def _sigmoid(x):
    # sigmoid(x) == 0.5 * tanh(0.5 * x) + 0.5 : a single EUP push instead of exp+divide.
    return 0.5 * jnp.tanh(0.5 * x) + 0.5


def _lstm_kernel(x_ref, w_ih_ref, w_hh_ref, b_ref, h_out_ref):
    """Sequential LSTM recurrence for one batch tile (PyTorch gate order i, f, g, o).

    x_ref:     (T, Bt, D)   time-major inputs for this batch tile (f32)
    w_ih_ref:  (D, 4H)      W_ih^T (f32)
    w_hh_ref:  (H, 4H)      W_hh^T (bf16, native MXU operand)
    b_ref:     (1, 4H)      b_ih + b_hh (f32)
    h_out_ref: (T, Bt, H)   hidden state for every timestep (bf16, lane-dense H=128)
    """
    T, Bt, _ = x_ref.shape
    H = h_out_ref.shape[-1]

    w_ih = w_ih_ref[...]
    w_hh = w_hh_ref[...]
    b = b_ref[...]

    def cell(h, c, x_t):
        # Input projection is independent of (h, c) -> overlapped with the serial chain.
        gx = jnp.dot(x_t, w_ih, preferred_element_type=jnp.float32) + b
        gh = jnp.dot(h.astype(jnp.bfloat16), w_hh, preferred_element_type=jnp.float32)
        gates = gx + gh                                     # (Bt, 4H) f32
        i_g = _sigmoid(gates[:, 0:H])
        f_g = _sigmoid(gates[:, H:2 * H])
        g_g = jnp.tanh(gates[:, 2 * H:3 * H])
        o_g = _sigmoid(gates[:, 3 * H:4 * H])
        c_new = f_g * c + i_g * g_g
        h_new = o_g * jnp.tanh(c_new)
        return h_new, c_new

    h = jnp.zeros((Bt, H), jnp.float32)
    c = jnp.zeros((Bt, H), jnp.float32)

    if T <= UNROLL_T:
        # Fully unrolled: constant indices, h/c live in vregs, scheduler overlaps the
        # independent x_t @ W_ih of step t with the dependent chain of step t-1.
        for t in range(T):
            h, c = cell(h, c, x_ref[t])
            h_out_ref[t] = h.astype(h_out_ref.dtype)
    else:
        def body(t, carry):
            h, c = carry
            h, c = cell(h, c, x_ref[t])
            h_out_ref[t] = h.astype(h_out_ref.dtype)
            return h, c
        jax.lax.fori_loop(0, T, body, (h, c), unroll=2)


def _ln_fc_kernel(h_ref, w_ref, b_ref, o_ref):
    """LayerNormal (torch.std unbiased, clamp(min=eps)) + Linear on one row tile.

    The LN affine has been folded into w_ref / b_ref in the wrapper; the output width
    is padded to 128 lanes (zero weights/bias in the pad columns -> unmasked stores).
    """
    h = h_ref[...].astype(jnp.float32)                                # (R, H)
    H = h.shape[-1]
    mu = jnp.mean(h, axis=-1, keepdims=True)
    diff = h - mu
    var = jnp.sum(diff * diff, axis=-1, keepdims=True) / (H - 1)      # unbiased (N-1)
    # max(sqrt(var), eps) == sqrt(max(var, eps^2)); rsqrt runs on the EUP slot.
    inv_sigma = jax.lax.rsqrt(jnp.maximum(var, EPS * EPS))
    normed = diff * inv_sigma
    o_ref[...] = (jnp.dot(normed, w_ref[...], preferred_element_type=jnp.float32)
                  + b_ref[...]).astype(o_ref.dtype)


def _row_tile(rows):
    for cand in (512, 256, 128, 64, 32, 16):      # <=512 keeps v7x (64 MiB VMEM) happy
        if rows % cand == 0:
            return cand
    return rows


def _nbytes(shape, dtype):
    return math.prod(shape) * jnp.dtype(dtype).itemsize


def lst_model_forward(x, params):
    """x: (B, T, D_in) float32 -> (B, T, 23) float32.  Matches LstModel.forward."""
    B, T, D = x.shape
    H = params["w_hh"].shape[0]

    # --- pad batch to a multiple of B_TILE and go time-major (XLA side) ---------------
    B_pad = ((B + B_TILE - 1) // B_TILE) * B_TILE
    x_tm = jnp.transpose(x, (1, 0, 2))                                 # (T, B, D)
    if B_pad != B:
        x_tm = jnp.pad(x_tm, ((0, 0), (0, B_pad - B), (0, 0)))
    w_hh_bf16 = params["w_hh"].astype(jnp.bfloat16)

    # --- 1) sequential recurrence: grid over independent batch tiles ------------------
    rec_need = 2 * (_nbytes((T, B_TILE, D), jnp.float32)
                    + _nbytes((D, 4 * H), jnp.float32)
                    + _nbytes((H, 4 * H), jnp.bfloat16)
                    + _nbytes((1, 4 * H), jnp.float32)
                    + _nbytes((T, B_TILE, H), jnp.bfloat16))
    rec_vmem = int(min(max(4 * rec_need, 8 << 20), 64 << 20))

    h_all = pl.pallas_call(
        _lstm_kernel,
        out_shape=jax.ShapeDtypeStruct((T, B_pad, H), jnp.bfloat16),
        grid=(B_pad // B_TILE,),
        in_specs=[
            pl.BlockSpec((T, B_TILE, D), lambda bt: (0, bt, 0)),       # x (time-major)
            pl.BlockSpec((D, 4 * H), lambda bt: (0, 0)),               # W_ih^T
            pl.BlockSpec((H, 4 * H), lambda bt: (0, 0)),               # W_hh^T (bf16)
            pl.BlockSpec((1, 4 * H), lambda bt: (0, 0)),               # bias
        ],
        out_specs=pl.BlockSpec((T, B_TILE, H), lambda bt: (0, bt, 0)),
        compiler_params=pltpu.CompilerParams(
            dimension_semantics=("parallel",),
            vmem_limit_bytes=rec_vmem),
    )(x_tm, params["w_ih"], w_hh_bf16, params["b"])

    # --- 2) fold LN affine into fc (exact), pad N=23 -> 128 lanes ----------------------
    fc_w_eff = params["ln_w"].reshape(H, 1) * params["fc_w"]                    # (H, 23)
    fc_b_eff = params["ln_b"].reshape(1, H) @ params["fc_w"] + params["fc_b"]   # (1, 23)
    fc_w_pad = jnp.zeros((H, N_PAD), jnp.float32).at[:, :NUM_CLASSES].set(fc_w_eff)
    fc_b_pad = jnp.zeros((1, N_PAD), jnp.float32).at[:, :NUM_CLASSES].set(fc_b_eff)

    # --- 3) LN + fc, row-tiled parallel grid -------------------------------------------
    rows = T * B_pad
    rt = _row_tile(rows)
    ln_need = 2 * (_nbytes((rt, H), jnp.bfloat16)
                   + _nbytes((H, N_PAD), jnp.float32)
                   + _nbytes((1, N_PAD), jnp.float32)
                   + _nbytes((rt, N_PAD), jnp.float32))
    ln_vmem = int(min(max(4 * ln_need, 8 << 20), 64 << 20))

    out_pad = pl.pallas_call(
        _ln_fc_kernel,
        out_shape=jax.ShapeDtypeStruct((rows, N_PAD), jnp.float32),
        grid=(rows // rt,),
        in_specs=[
            pl.BlockSpec((rt, H), lambda i: (i, 0)),
            pl.BlockSpec((H, N_PAD), lambda i: (0, 0)),
            pl.BlockSpec((1, N_PAD), lambda i: (0, 0)),
        ],
        out_specs=pl.BlockSpec((rt, N_PAD), lambda i: (i, 0)),
        compiler_params=pltpu.CompilerParams(
            dimension_semantics=("parallel",),
            vmem_limit_bytes=ln_vmem),
    )(h_all.reshape(rows, H), fc_w_pad, fc_b_pad)

    # Drop batch padding + lane padding, back to (B, T, 23).  Tiny slice/transpose.
    out = out_pad.reshape(T, B_pad, N_PAD)[:, :B, :NUM_CLASSES]
    return jnp.transpose(out, (1, 0, 2))


def init_params(key, input_size, hidden_size):
    """Deterministic parameter init matching the shapes of LstModel.__init__."""
    H, D = hidden_size, input_size
    ks = jax.random.split(key, 6)
    k = 1.0 / math.sqrt(H)
    # nn.LSTM default: uniform(-1/sqrt(H), 1/sqrt(H)); torch shapes (4H, D) / (4H, H)
    w_ih_t = jax.random.uniform(ks[0], (4 * H, D), jnp.float32, -k, k)
    w_hh_t = jax.random.uniform(ks[1], (4 * H, H), jnp.float32, -k, k)
    b_ih = jax.random.uniform(ks[2], (4 * H,), jnp.float32, -k, k)
    b_hh = jax.random.uniform(ks[3], (4 * H,), jnp.float32, -k, k)
    # fc: kaiming_normal_ on (23, 128) weight, bias ~ N(0, 0.001)
    fc_w_t = jax.random.normal(ks[4], (NUM_CLASSES, 128), jnp.float32) * math.sqrt(2.0 / 128.0)
    fc_b = jax.random.normal(ks[5], (NUM_CLASSES,), jnp.float32) * 0.001
    return {
        "w_ih": w_ih_t.T,                          # (D, 4H)
        "w_hh": w_hh_t.T,                          # (H, 4H)
        "b": (b_ih + b_hh).reshape(1, 4 * H),      # (1, 4H)
        "ln_w": jnp.ones((1, H), jnp.float32),
        "ln_b": jnp.zeros((1, H), jnp.float32),
        "fc_w": fc_w_t.T,                          # (128, 23)
        "fc_b": fc_b.reshape(1, NUM_CLASSES),      # (1, 23)
    }


def _reference_forward(x, params):
    """Pure-JAX f32 reference (lax.scan LSTM + LayerNormal + fc)."""
    H = params["w_hh"].shape[0]
    B = x.shape[0]

    def step(carry, x_t):
        h, c = carry
        gates = x_t @ params["w_ih"] + h @ params["w_hh"] + params["b"]
        i = jax.nn.sigmoid(gates[:, :H])
        f = jax.nn.sigmoid(gates[:, H:2 * H])
        g = jnp.tanh(gates[:, 2 * H:3 * H])
        o = jax.nn.sigmoid(gates[:, 3 * H:])
        c_new = f * c + i * g
        h_new = o * jnp.tanh(c_new)
        return (h_new, c_new), h_new

    init = (jnp.zeros((B, H), jnp.float32), jnp.zeros((B, H), jnp.float32))
    _, hs = jax.lax.scan(step, init, jnp.transpose(x, (1, 0, 2)))
    hs = jnp.transpose(hs, (1, 0, 2))  # (B, T, H)
    mu = jnp.mean(hs, axis=-1, keepdims=True)
    var = jnp.sum((hs - mu) ** 2, axis=-1, keepdims=True) / (H - 1)
    sigma = jnp.maximum(jnp.sqrt(var), EPS)
    normed = (hs - mu) / sigma * params["ln_w"][0] + params["ln_b"][0]
    return normed @ params["fc_w"] + params["fc_b"][0]


if __name__ == "__main__":
    B, T, D_IN, HIDDEN = 2, 8, 16, 128   # hidden must be 128 (fc is Linear(128, 23))
    root = jax.random.PRNGKey(0)
    kx, kp = jax.random.split(root)
    x = jax.random.normal(kx, (B, T, D_IN), jnp.float32)
    params = init_params(kp, D_IN, HIDDEN)

    out = jax.block_until_ready(lst_model_forward(x, params))
    assert out.shape == (B, T, NUM_CLASSES), out.shape

    ref = jax.block_until_ready(_reference_forward(x, params))
    # bf16 MXU operands for h @ W_hh and the bf16 hidden-state intermediate justify a
    # slightly looser tolerance than pure f32.
    max_err = float(jnp.max(jnp.abs(out - ref)))
    assert jnp.allclose(out, ref, atol=2e-2, rtol=2e-2), f"mismatch vs reference, max_err={max_err}"

    print("KERNEL_OK")
</pallas_src>

<mosaic_0001>
module attributes {stable_mosaic.version = 11 : i64} {
  func.func @_lstm_kernel(%arg0: i32, %arg1: memref<8x16x16xf32, #tpu.memory_space<vmem>>, %arg2: memref<16x512xf32, #tpu.memory_space<vmem>>, %arg3: memref<128x512xbf16, #tpu.memory_space<vmem>>, %arg4: memref<1x512xf32, #tpu.memory_space<vmem>>, %arg5: memref<8x16x128xbf16, #tpu.memory_space<vmem>>) attributes {dimension_semantics = [#tpu.dimension_semantics<parallel>], iteration_bounds = array<i64: 1>, scalar_prefetch = 0 : i64, scratch_operands = 0 : i64, tpu.core_type = #tpu.core_type<tc>, window_params = [{transform_indices = @transform_0, window_bounds = array<i64: 8, 16, 16>}, {pipeline_mode = #tpu.pipeline_mode<synchronous>, transform_indices = @transform_1, window_bounds = array<i64: 16, 512>}, {pipeline_mode = #tpu.pipeline_mode<synchronous>, transform_indices = @transform_2, window_bounds = array<i64: 128, 512>}, {pipeline_mode = #tpu.pipeline_mode<synchronous>, transform_indices = @transform_3, window_bounds = array<i64: 1, 512>}, {transform_indices = @transform_4, window_bounds = array<i64: 8, 16, 128>}]} {
    %c0 = arith.constant 0 : index
    %c0_0 = arith.constant 0 : index
    %0 = vector.load %arg2[%c0, %c0_0] : memref<16x512xf32, #tpu.memory_space<vmem>>, vector<16x512xf32>
    %c0_1 = arith.constant 0 : index
    %c0_2 = arith.constant 0 : index
    %1 = vector.load %arg3[%c0_1, %c0_2] : memref<128x512xbf16, #tpu.memory_space<vmem>>, vector<128x512xbf16>
    %c0_3 = arith.constant 0 : index
    %c0_4 = arith.constant 0 : index
    %2 = vector.load %arg4[%c0_3, %c0_4] : memref<1x512xf32, #tpu.memory_space<vmem>>, vector<1x512xf32>
    %cst = arith.constant 0.000000e+00 : f32
    %3 = vector.broadcast %cst : f32 to vector<16x128xf32>
    %cst_5 = arith.constant 0.000000e+00 : f32
    %4 = vector.broadcast %cst_5 : f32 to vector<16x128xf32>
    %c0_6 = arith.constant 0 : index
    %c0_7 = arith.constant 0 : index
    %c0_8 = arith.constant 0 : index
    %5 = vector.load %arg1[%c0_6, %c0_7, %c0_8] : memref<8x16x16xf32, #tpu.memory_space<vmem>>, vector<1x16x16xf32>
    %6 = vector.shape_cast %5 : vector<1x16x16xf32> to vector<16x16xf32>
    %cst_9 = arith.constant dense<0.000000e+00> : vector<16x512xf32>
    %7 = tpu.matmul %6, %0, %cst_9 {dimension_numbers = #tpu.dot_dimension_numbers<[1], [0], [0], [1], [0, 0, 1, 1], [], []>} : vector<16x16xf32>, vector<16x512xf32>, vector<16x512xf32> -> vector<16x512xf32>
    %8 = vector.broadcast %2 : vector<1x512xf32> to vector<16x512xf32>
    %9 = arith.addf %7, %8 : vector<16x512xf32>
    %10 = arith.truncf %3 : vector<16x128xf32> to vector<16x128xbf16>
    %cst_10 = arith.constant dense<0.000000e+00> : vector<16x512xf32>
    %11 = tpu.matmul %10, %1, %cst_10 {dimension_numbers = #tpu.dot_dimension_numbers<[1], [0], [0], [1], [0, 0, 1, 1], [], []>} : vector<16x128xbf16>, vector<128x512xbf16>, vector<16x512xf32> -> vector<16x512xf32>
    %12 = arith.addf %9, %11 : vector<16x512xf32>
    %13 = vector.extract_strided_slice %12 {offsets = [0, 0], sizes = [16, 128], strides = [1, 1]} : vector<16x512xf32> to vector<16x128xf32>
    %cst_11 = arith.constant 5.000000e-01 : f32
    %14 = vector.broadcast %cst_11 : f32 to vector<16x128xf32>
    %15 = arith.mulf %14, %13 : vector<16x128xf32>
    %16 = math.tanh %15 : vector<16x128xf32>
    %cst_12 = arith.constant 5.000000e-01 : f32
    %17 = vector.broadcast %cst_12 : f32 to vector<16x128xf32>
    %18 = arith.mulf %17, %16 : vector<16x128xf32>
    %cst_13 = arith.constant 5.000000e-01 : f32
    %19 = vector.broadcast %cst_13 : f32 to vector<16x128xf32>
    %20 = arith.addf %18, %19 : vector<16x128xf32>
    %21 = vector.extract_strided_slice %12 {offsets = [0, 128], sizes = [16, 128], strides = [1, 1]} : vector<16x512xf32> to vector<16x128xf32>
    %cst_14 = arith.constant 5.000000e-01 : f32
    %22 = vector.broadcast %cst_14 : f32 to vector<16x128xf32>
    %23 = arith.mulf %22, %21 : vector<16x128xf32>
    %24 = math.tanh %23 : vector<16x128xf32>
    %cst_15 = arith.constant 5.000000e-01 : f32
    %25 = vector.broadcast %cst_15 : f32 to vector<16x128xf32>
    %26 = arith.mulf %25, %24 : vector<16x128xf32>
    %cst_16 = arith.constant 5.000000e-01 : f32
    %27 = vector.broadcast %cst_16 : f32 to vector<16x128xf32>
    %28 = arith.addf %26, %27 : vector<16x128xf32>
    %29 = vector.extract_strided_slice %12 {offsets = [0, 256], sizes = [16, 128], strides = [1, 1]} : vector<16x512xf32> to vector<16x128xf32>
    %30 = math.tanh %29 : vector<16x128xf32>
    %31 = vector.extract_strided_slice %12 {offsets = [0, 384], sizes = [16, 128], strides = [1, 1]} : vector<16x512xf32> to vector<16x128xf32>
    %cst_17 = arith.constant 5.000000e-01 : f32
    %32 = vector.broadcast %cst_17 : f32 to vector<16x128xf32>
    %33 = arith.mulf %32, %31 : vector<16x128xf32>
    %34 = math.tanh %33 : vector<16x128xf32>
    %cst_18 = arith.constant 5.000000e-01 : f32
    %35 = vector.broadcast %cst_18 : f32 to vector<16x128xf32>
    %36 = arith.mulf %35, %34 : vector<16x128xf32>
    %cst_19 = arith.constant 5.000000e-01 : f32
    %37 = vector.broadcast %cst_19 : f32 to vector<16x128xf32>
    %38 = arith.addf %36, %37 : vector<16x128xf32>
    %39 = arith.mulf %28, %4 : vector<16x128xf32>
    %40 = arith.mulf %20, %30 : vector<16x128xf32>
    %41 = arith.addf %39, %40 : vector<16x128xf32>
    %42 = math.tanh %41 : vector<16x128xf32>
    %43 = arith.mulf %38, %42 : vector<16x128xf32>
    %44 = arith.truncf %43 : vector<16x128xf32> to vector<16x128xbf16>
    %c0_20 = arith.constant 0 : index
    %c0_21 = arith.constant 0 : index
    %c0_22 = arith.constant 0 : index
    %45 = vector.load %arg5[%c0_20, %c0_21, %c0_22] : memref<8x16x128xbf16, #tpu.memory_space<vmem>>, vector<1x16x128xbf16>
    %46 = vector.shape_cast %45 : vector<1x16x128xbf16> to vector<16x128xbf16>
    %47 = vector.shape_cast %44 : vector<16x128xbf16> to vector<1x16x128xbf16>
    tpu.vector_store %arg5[%c0_20, %c0_21, %c0_22], %47 {strides = array<i32>} : memref<8x16x128xbf16, #tpu.memory_space<vmem>>, vector<1x16x128xbf16>,
    %c1 = arith.constant 1 : index
    %c0_23 = arith.constant 0 : index
    %c0_24 = arith.constant 0 : index
    %48 = vector.load %arg1[%c1, %c0_23, %c0_24] : memref<8x16x16xf32, #tpu.memory_space<vmem>>, vector<1x16x16xf32>
    %49 = vector.shape_cast %48 : vector<1x16x16xf32> to vector<16x16xf32>
    %cst_25 = arith.constant dense<0.000000e+00> : vector<16x512xf32>
    %50 = tpu.matmul %49, %0, %cst_25 {dimension_numbers = #tpu.dot_dimension_numbers<[1], [0], [0], [1], [0, 0, 1, 1], [], []>} : vector<16x16xf32>, vector<16x512xf32>, vector<16x512xf32> -> vector<16x512xf32>
    %51 = vector.broadcast %2 : vector<1x512xf32> to vector<16x512xf32>
    %52 = arith.addf %50, %51 : vector<16x512xf32>
    %53 = arith.truncf %43 : vector<16x128xf32> to vector<16x128xbf16>
    %cst_26 = arith.constant dense<0.000000e+00> : vector<16x512xf32>
    %54 = tpu.matmul %53, %1, %cst_26 {dimension_numbers = #tpu.dot_dimension_numbers<[1], [0], [0], [1], [0, 0, 1, 1], [], []>} : vector<16x128xbf16>, vector<128x512xbf16>, vector<16x512xf32> -> vector<16x512xf32>
    %55 = arith.addf %52, %54 : vector<16x512xf32>
    %56 = vector.extract_strided_slice %55 {offsets = [0, 0], sizes = [16, 128], strides = [1, 1]} : vector<16x512xf32> to vector<16x128xf32>
    %cst_27 = arith.constant 5.000000e-01 : f32
    %57 = vector.broadcast %cst_27 : f32 to vector<16x128xf32>
    %58 = arith.mulf %57, %56 : vector<16x128xf32>
    %59 = math.tanh %58 : vector<16x128xf32>
    %cst_28 = arith.constant 5.000000e-01 : f32
    %60 = vector.broadcast %cst_28 : f32 to vector<16x128xf32>
    %61 = arith.mulf %60, %59 : vector<16x128xf32>
    %cst_29 = arith.constant 5.000000e-01 : f32
    %62 = vector.broadcast %cst_29 : f32 to vector<16x128xf32>
    %63 = arith.addf %61, %62 : vector<16x128xf32>
    %64 = vector.extract_strided_slice %55 {offsets = [0, 128], sizes = [16, 128], strides = [1, 1]} : vector<16x512xf32> to vector<16x128xf32>
    %cst_30 = arith.constant 5.000000e-01 : f32
    %65 = vector.broadcast %cst_30 : f32 to vector<16x128xf32>
    %66 = arith.mulf %65, %64 : vector<16x128xf32>
    %67 = math.tanh %66 : vector<16x128xf32>
    %cst_31 = arith.constant 5.000000e-01 : f32
    %68 = vector.broadcast %cst_31 : f32 to vector<16x128xf32>
    %69 = arith.mulf %68, %67 : vector<16x128xf32>
    %cst_32 = arith.constant 5.000000e-01 : f32
    %70 = vector.broadcast %cst_32 : f32 to vector<16x128xf32>
    %71 = arith.addf %69, %70 : vector<16x128xf32>
    %72 = vector.extract_strided_slice %55 {offsets = [0, 256], sizes = [16, 128], strides = [1, 1]} : vector<16x512xf32> to vector<16x128xf32>
    %73 = math.tanh %72 : vector<16x128xf32>
    %74 = vector.extract_strided_slice %55 {offsets = [0, 384], sizes = [16, 128], strides = [1, 1]} : vector<16x512xf32> to vector<16x128xf32>
    %cst_33 = arith.constant 5.000000e-01 : f32
    %75 = vector.broadcast %cst_33 : f32 to vector<16x128xf32>
    %76 = arith.mulf %75, %74 : vector<16x128xf32>
    %77 = math.tanh %76 : vector<16x128xf32>
    %cst_34 = arith.constant 5.000000e-01 : f32
    %78 = vector.broadcast %cst_34 : f32 to vector<16x128xf32>
    %79 = arith.mulf %78, %77 : vector<16x128xf32>
    %cst_35 = arith.constant 5.000000e-01 : f32
    %80 = vector.broadcast %cst_35 : f32 to vector<16x128xf32>
    %81 = arith.addf %79, %80 : vector<16x128xf32>
    %82 = arith.mulf %71, %41 : vector<16x128xf32>
    %83 = arith.mulf %63, %73 : vector<16x128xf32>
    %84 = arith.addf %82, %83 : vector<16x128xf32>
    %85 = math.tanh %84 : vector<16x128xf32>
    %86 = arith.mulf %81, %85 : vector<16x128xf32>
    %87 = arith.truncf %86 : vector<16x128xf32> to vector<16x128xbf16>
    %c1_36 = arith.constant 1 : index
    %c0_37 = arith.constant 0 : index
    %c0_38 = arith.constant 0 : index
    %88 = vector.load %arg5[%c1_36, %c0_37, %c0_38] : memref<8x16x128xbf16, #tpu.memory_space<vmem>>, vector<1x16x128xbf16>
    %89 = vector.shape_cast %88 : vector<1x16x128xbf16> to vector<16x128xbf16>
    %90 = vector.shape_cast %87 : vector<16x128xbf16> to vector<1x16x128xbf16>
    tpu.vector_store %arg5[%c1_36, %c0_37, %c0_38], %90 {strides = array<i32>} : memref<8x16x128xbf16, #tpu.memory_space<vmem>>, vector<1x16x128xbf16>,
    %c2 = arith.constant 2 : index
    %c0_39 = arith.constant 0 : index
    %c0_40 = arith.constant 0 : index
    %91 = vector.load %arg1[%c2, %c0_39, %c0_40] : memref<8x16x16xf32, #tpu.memory_space<vmem>>, vector<1x16x16xf32>
    %92 = vector.shape_cast %91 : vector<1x16x16xf32> to vector<16x16xf32>
    %cst_41 = arith.constant dense<0.000000e+00> : vector<16x512xf32>
    %93 = tpu.matmul %92, %0, %cst_41 {dimension_numbers = #tpu.dot_dimension_numbers<[1], [0], [0], [1], [0, 0, 1, 1], [], []>} : vector<16x16xf32>, vector<16x512xf32>, vector<16x512xf32> -> vector<16x512xf32>
    %94 = vector.broadcast %2 : vector<1x512xf32> to vector<16x512xf32>
    %95 = arith.addf %93, %94 : vector<16x512xf32>
    %96 = arith.truncf %86 : vector<16x128xf32> to vector<16x128xbf16>
    %cst_42 = arith.constant dense<0.000000e+00> : vector<16x512xf32>
    %97 = tpu.matmul %96, %1, %cst_42 {dimension_numbers = #tpu.dot_dimension_numbers<[1], [0], [0], [1], [0, 0, 1, 1], [], []>} : vector<16x128xbf16>, vector<128x512xbf16>, vector<16x512xf32> -> vector<16x512xf32>
    %98 = arith.addf %95, %97 : vector<16x512xf32>
    %99 = vector.extract_strided_slice %98 {offsets = [0, 0], sizes = [16, 128], strides = [1, 1]} : vector<16x512xf32> to vector<16x128xf32>
    %cst_43 = arith.constant 5.000000e-01 : f32
    %100 = vector.broadcast %cst_43 : f32 to vector<16x128xf32>
    %101 = arith.mulf %100, %99 : vector<16x128xf32>
    %102 = math.tanh %101 : vector<16x128xf32>
    %cst_44 = arith.constant 5.000000e-01 : f32
    %103 = vector.broadcast %cst_44 : f32 to vector<16x128xf32>
    %104 = arith.mulf %103, %102 : vector<16x128xf32>
    %cst_45 = arith.constant 5.000000e-01 : f32
    %105 = vector.broadcast %cst_45 : f32 to vector<16x128xf32>
    %106 = arith.addf %104, %105 : vector<16x128xf32>
    %107 = vector.extract_strided_slice %98 {offsets = [0, 128], sizes = [16, 128], strides = [1, 1]} : vector<16x512xf32> to vector<16x128xf32>
    %cst_46 = arith.constant 5.000000e-01 : f32
    %108 = vector.broadcast %cst_46 : f32 to vector<16x128xf32>
    %109 = arith.mulf %108, %107 : vector<16x128xf32>
    %110 = math.tanh %109 : vector<16x128xf32>
    %cst_47 = arith.constant 5.000000e-01 : f32
    %111 = vector.broadcast %cst_47 : f32 to vector<16x128xf32>
    %112 = arith.mulf %111, %110 : vector<16x128xf32>
    %cst_48 = arith.constant 5.000000e-01 : f32
    %113 = vector.broadcast %cst_48 : f32 to vector<16x128xf32>
    %114 = arith.addf %112, %113 : vector<16x128xf32>
    %115 = vector.extract_strided_slice %98 {offsets = [0, 256], sizes = [16, 128], strides = [1, 1]} : vector<16x512xf32> to vector<16x128xf32>
    %116 = math.tanh %115 : vector<16x128xf32>
    %117 = vector.extract_strided_slice %98 {offsets = [0, 384], sizes = [16, 128], strides = [1, 1]} : vector<16x512xf32> to vector<16x128xf32>
    %cst_49 = arith.constant 5.000000e-01 : f32
    %118 = vector.broadcast %cst_49 : f32 to vector<16x128xf32>
    %119 = arith.mulf %118, %117 : vector<16x128xf32>
    %120 = math.tanh %119 : vector<16x128xf32>
    %cst_50 = arith.constant 5.000000e-01 : f32
    %121 = vector.broadcast %cst_50 : f32 to vector<16x128xf32>
    %122 = arith.mulf %121, %120 : vector<16x128xf32>
    %cst_51 = arith.constant 5.000000e-01 : f32
    %123 = vector.broadcast %cst_51 : f32 to vector<16x128xf32>
    %124 = arith.addf %122, %123 : vector<16x128xf32>
    %125 = arith.mulf %114, %84 : vector<16x128xf32>
    %126 = arith.mulf %106, %116 : vector<16x128xf32>
    %127 = arith.addf %125, %126 : vector<16x128xf32>
    %128 = math.tanh %127 : vector<16x128xf32>
    %129 = arith.mulf %124, %128 : vector<16x128xf32>
    %130 = arith.truncf %129 : vector<16x128xf32> to vector<16x128xbf16>
    %c2_52 = arith.constant 2 : index
    %c0_53 = arith.constant 0 : index
    %c0_54 = arith.constant 0 : index
    %131 = vector.load %arg5[%c2_52, %c0_53, %c0_54] : memref<8x16x128xbf16, #tpu.memory_space<vmem>>, vector<1x16x128xbf16>
    %132 = vector.shape_cast %131 : vector<1x16x128xbf16> to vector<16x128xbf16>
    %133 = vector.shape_cast %130 : vector<16x128xbf16> to vector<1x16x128xbf16>
    tpu.vector_store %arg5[%c2_52, %c0_53, %c0_54], %133 {strides = array<i32>} : memref<8x16x128xbf16, #tpu.memory_space<vmem>>, vector<1x16x128xbf16>,
    %c3 = arith.constant 3 : index
    %c0_55 = arith.constant 0 : index
    %c0_56 = arith.constant 0 : index
    %134 = vector.load %arg1[%c3, %c0_55, %c0_56] : memref<8x16x16xf32, #tpu.memory_space<vmem>>, vector<1x16x16xf32>
    %135 = vector.shape_cast %134 : vector<1x16x16xf32> to vector<16x16xf32>
    %cst_57 = arith.constant dense<0.000000e+00> : vector<16x512xf32>
    %136 = tpu.matmul %135, %0, %cst_57 {dimension_numbers = #tpu.dot_dimension_numbers<[1], [0], [0], [1], [0, 0, 1, 1], [], []>} : vector<16x16xf32>, vector<16x512xf32>, vector<16x512xf32> -> vector<16x512xf32>
    %137 = vector.broadcast %2 : vector<1x512xf32> to vector<16x512xf32>
    %138 = arith.addf %136, %137 : vector<16x512xf32>
    %139 = arith.truncf %129 : vector<16x128xf32> to vector<16x128xbf16>
    %cst_58 = arith.constant dense<0.000000e+00> : vector<16x512xf32>
    %140 = tpu.matmul %139, %1, %cst_58 {dimension_numbers = #tpu.dot_dimension_numbers<[1], [0], [0], [1], [0, 0, 1, 1], [], []>} : vector<16x128xbf16>, vector<128x512xbf16>, vector<16x512xf32> -> vector<16x512xf32>
    %141 = arith.addf %138, %140 : vector<16x512xf32>
    %142 = vector.extract_strided_slice %141 {offsets = [0, 0], sizes = [16, 128], strides = [1, 1]} : vector<16x512xf32> to vector<16x128xf32>
    %cst_59 = arith.constant 5.000000e-01 : f32
    %143 = vector.broadcast %cst_59 : f32 to vector<16x128xf32>
    %144 = arith.mulf %143, %142 : vector<16x128xf32>
    %145 = math.tanh %144 : vector<16x128xf32>
    %cst_60 = arith.constant 5.000000e-01 : f32
    %146 = vector.broadcast %cst_60 : f32 to vector<16x128xf32>
    %147 = arith.mulf %146, %145 : vector<16x128xf32>
    %cst_61 = arith.constant 5.000000e-01 : f32
    %148 = vector.broadcast %cst_61 : f32 to vector<16x128xf32>
    %149 = arith.addf %147, %148 : vector<16x128xf32>
    %150 = vector.extract_strided_slice %141 {offsets = [0, 128], sizes = [16, 128], strides = [1, 1]} : vector<16x512xf32> to vector<16x128xf32>
    %cst_62 = arith.constant 5.000000e-01 : f32
    %151 = vector.broadcast %cst_62 : f32 to vector<16x128xf32>
    %152 = arith.mulf %151, %150 : vector<16x128xf32>
    %153 = math.tanh %152 : vector<16x128xf32>
    %cst_63 = arith.constant 5.000000e-01 : f32
    %154 = vector.broadcast %cst_63 : f32 to vector<16x128xf32>
    %155 = arith.mulf %154, %153 : vector<16x128xf32>
    %cst_64 = arith.constant 5.000000e-01 : f32
    %156 = vector.broadcast %cst_64 : f32 to vector<16x128xf32>
    %157 = arith.addf %155, %156 : vector<16x128xf32>
    %158 = vector.extract_strided_slice %141 {offsets = [0, 256], sizes = [16, 128], strides = [1, 1]} : vector<16x512xf32> to vector<16x128xf32>
    %159 = math.tanh %158 : vector<16x128xf32>
    %160 = vector.extract_strided_slice %141 {offsets = [0, 384], sizes = [16, 128], strides = [1, 1]} : vector<16x512xf32> to vector<16x128xf32>
    %cst_65 = arith.constant 5.000000e-01 : f32
    %161 = vector.broadcast %cst_65 : f32 to vector<16x128xf32>
    %162 = arith.mulf %161, %160 : vector<16x128xf32>
    %163 = math.tanh %162 : vector<16x128xf32>
    %cst_66 = arith.constant 5.000000e-01 : f32
    %164 = vector.broadcast %cst_66 : f32 to vector<16x128xf32>
    %165 = arith.mulf %164, %163 : vector<16x128xf32>
    %cst_67 = arith.constant 5.000000e-01 : f32
    %166 = vector.broadcast %cst_67 : f32 to vector<16x128xf32>
    %167 = arith.addf %165, %166 : vector<16x128xf32>
    %168 = arith.mulf %157, %127 : vector<16x128xf32>
    %169 = arith.mulf %149, %159 : vector<16x128xf32>
    %170 = arith.addf %168, %169 : vector<16x128xf32>
    %171 = math.tanh %170 : vector<16x128xf32>
    %172 = arith.mulf %167, %171 : vector<16x128xf32>
    %173 = arith.truncf %172 : vector<16x128xf32> to vector<16x128xbf16>
    %c3_68 = arith.constant 3 : index
    %c0_69 = arith.constant 0 : index
    %c0_70 = arith.constant 0 : index
    %174 = vector.load %arg5[%c3_68, %c0_69, %c0_70] : memref<8x16x128xbf16, #tpu.memory_space<vmem>>, vector<1x16x128xbf16>
    %175 = vector.shape_cast %174 : vector<1x16x128xbf16> to vector<16x128xbf16>
    %176 = vector.shape_cast %173 : vector<16x128xbf16> to vector<1x16x128xbf16>
    tpu.vector_store %arg5[%c3_68, %c0_69, %c0_70], %176 {strides = array<i32>} : memref<8x16x128xbf16, #tpu.memory_space<vmem>>, vector<1x16x128xbf16>,
    %c4 = arith.constant 4 : index
    %c0_71 = arith.constant 0 : index
    %c0_72 = arith.constant 0 : index
    %177 = vector.load %arg1[%c4, %c0_71, %c0_72] : memref<8x16x16xf32, #tpu.memory_space<vmem>>, vector<1x16x16xf32>
    %178 = vector.shape_cast %177 : vector<1x16x16xf32> to vector<16x16xf32>
    %cst_73 = arith.constant dense<0.000000e+00> : vector<16x512xf32>
    %179 = tpu.matmul %178, %0, %cst_73 {dimension_numbers = #tpu.dot_dimension_numbers<[1], [0], [0], [1], [0, 0, 1, 1], [], []>} : vector<16x16xf32>, vector<16x512xf32>, vector<16x512xf32> -> vector<16x512xf32>
    %180 = vector.broadcast %2 : vector<1x512xf32> to vector<16x512xf32>
    %181 = arith.addf %179, %180 : vector<16x512xf32>
    %182 = arith.truncf %172 : vector<16x128xf32> to vector<16x128xbf16>
    %cst_74 = arith.constant dense<0.000000e+00> : vector<16x512xf32>
    %183 = tpu.matmul %182, %1, %cst_74 {dimension_numbers = #tpu.dot_dimension_numbers<[1], [0], [0], [1], [0, 0, 1, 1], [], []>} : vector<16x128xbf16>, vector<128x512xbf16>, vector<16x512xf32> -> vector<16x512xf32>
    %184 = arith.addf %181, %183 : vector<16x512xf32>
    %185 = vector.extract_strided_slice %184 {offsets = [0, 0], sizes = [16, 128], strides = [1, 1]} : vector<16x512xf32> to vector<16x128xf32>
    %cst_75 = arith.constant 5.000000e-01 : f32
    %186 = vector.broadcast %cst_75 : f32 to vector<16x128xf32>
    %187 = arith.mulf %186, %185 : vector<16x128xf32>
    %188 = math.tanh %187 : vector<16x128xf32>
    %cst_76 = arith.constant 5.000000e-01 : f32
    %189 = vector.broadcast %cst_76 : f32 to vector<16x128xf32>
    %190 = arith.mulf %189, %188 : vector<16x128xf32>
    %cst_77 = arith.constant 5.000000e-01 : f32
    %191 = vector.broadcast %cst_77 : f32 to vector<16x128xf32>
    %192 = arith.addf %190, %191 : vector<16x128xf32>
    %193 = vector.extract_strided_slice %184 {offsets = [0, 128], sizes = [16, 128], strides = [1, 1]} : vector<16x512xf32> to vector<16x128xf32>
    %cst_78 = arith.constant 5.000000e-01 : f32
    %194 = vector.broadcast %cst_78 : f32 to vector<16x128xf32>
    %195 = arith.mulf %194, %193 : vector<16x128xf32>
    %196 = math.tanh %195 : vector<16x128xf32>
    %cst_79 = arith.constant 5.000000e-01 : f32
    %197 = vector.broadcast %cst_79 : f32 to vector<16x128xf32>
    %198 = arith.mulf %197, %196 : vector<16x128xf32>
    %cst_80 = arith.constant 5.000000e-01 : f32
    %199 = vector.broadcast %cst_80 : f32 to vector<16x128xf32>
    %200 = arith.addf %198, %199 : vector<16x128xf32>
    %201 = vector.extract_strided_slice %184 {offsets = [0, 256], sizes = [16, 128], strides = [1, 1]} : vector<16x512xf32> to vector<16x128xf32>
    %202 = math.tanh %201 : vector<16x128xf32>
    %203 = vector.extract_strided_slice %184 {offsets = [0, 384], sizes = [16, 128], strides = [1, 1]} : vector<16x512xf32> to vector<16x128xf32>
    %cst_81 = arith.constant 5.000000e-01 : f32
    %204 = vector.broadcast %cst_81 : f32 to vector<16x128xf32>
    %205 = arith.mulf %204, %203 : vector<16x128xf32>
    %206 = math.tanh %205 : vector<16x128xf32>
    %cst_82 = arith.constant 5.000000e-01 : f32
    %207 = vector.broadcast %cst_82 : f32 to vector<16x128xf32>
    %208 = arith.mulf %207, %206 : vector<16x128xf32>
    %cst_83 = arith.constant 5.000000e-01 : f32
    %209 = vector.broadcast %cst_83 : f32 to vector<16x128xf32>
    %210 = arith.addf %208, %209 : vector<16x128xf32>
    %211 = arith.mulf %200, %170 : vector<16x128xf32>
    %212 = arith.mulf %192, %202 : vector<16x128xf32>
    %213 = arith.addf %211, %212 : vector<16x128xf32>
    %214 = math.tanh %213 : vector<16x128xf32>
    %215 = arith.mulf %210, %214 : vector<16x128xf32>
    %216 = arith.truncf %215 : vector<16x128xf32> to vector<16x128xbf16>
    %c4_84 = arith.constant 4 : index
    %c0_85 = arith.constant 0 : index
    %c0_86 = arith.constant 0 : index
    %217 = vector.load %arg5[%c4_84, %c0_85, %c0_86] : memref<8x16x128xbf16, #tpu.memory_space<vmem>>, vector<1x16x128xbf16>
    %218 = vector.shape_cast %217 : vector<1x16x128xbf16> to vector<16x128xbf16>
    %219 = vector.shape_cast %216 : vector<16x128xbf16> to vector<1x16x128xbf16>
    tpu.vector_store %arg5[%c4_84, %c0_85, %c0_86], %219 {strides = array<i32>} : memref<8x16x128xbf16, #tpu.memory_space<vmem>>, vector<1x16x128xbf16>,
    %c5 = arith.constant 5 : index
    %c0_87 = arith.constant 0 : index
    %c0_88 = arith.constant 0 : index
    %220 = vector.load %arg1[%c5, %c0_87, %c0_88] : memref<8x16x16xf32, #tpu.memory_space<vmem>>, vector<1x16x16xf32>
    %221 = vector.shape_cast %220 : vector<1x16x16xf32> to vector<16x16xf32>
    %cst_89 = arith.constant dense<0.000000e+00> : vector<16x512xf32>
    %222 = tpu.matmul %221, %0, %cst_89 {dimension_numbers = #tpu.dot_dimension_numbers<[1], [0], [0], [1], [0, 0, 1, 1], [], []>} : vector<16x16xf32>, vector<16x512xf32>, vector<16x512xf32> -> vector<16x512xf32>
    %223 = vector.broadcast %2 : vector<1x512xf32> to vector<16x512xf32>
    %224 = arith.addf %222, %223 : vector<16x512xf32>
    %225 = arith.truncf %215 : vector<16x128xf32> to vector<16x128xbf16>
    %cst_90 = arith.constant dense<0.000000e+00> : vector<16x512xf32>
    %226 = tpu.matmul %225, %1, %cst_90 {dimension_numbers = #tpu.dot_dimension_numbers<[1], [0], [0], [1], [0, 0, 1, 1], [], []>} : vector<16x128xbf16>, vector<128x512xbf16>, vector<16x512xf32> -> vector<16x512xf32>
    %227 = arith.addf %224, %226 : vector<16x512xf32>
    %228 = vector.extract_strided_slice %227 {offsets = [0, 0], sizes = [16, 128], strides = [1, 1]} : vector<16x512xf32> to vector<16x128xf32>
    %cst_91 = arith.constant 5.000000e-01 : f32
    %229 = vector.broadcast %cst_91 : f32 to vector<16x128xf32>
    %230 = arith.mulf %229, %228 : vector<16x128xf32>
    %231 = math.tanh %230 : vector<16x128xf32>
    %cst_92 = arith.constant 5.000000e-01 : f32
    %232 = vector.broadcast %cst_92 : f32 to vector<16x128xf32>
    %233 = arith.mulf %232, %231 : vector<16x128xf32>
    %cst_93 = arith.constant 5.000000e-01 : f32
    %234 = vector.broadcast %cst_93 : f32 to vector<16x128xf32>
    %235 = arith.addf %233, %234 : vector<16x128xf32>
    %236 = vector.extract_strided_slice %227 {offsets = [0, 128], sizes = [16, 128], strides = [1, 1]} : vector<16x512xf32> to vector<16x128xf32>
    %cst_94 = arith.constant 5.000000e-01 : f32
    %237 = vector.broadcast %cst_94 : f32 to vector<16x128xf32>
    %238 = arith.mulf %237, %236 : vector<16x128xf32>
    %239 = math.tanh %238 : vector<16x128xf32>
    %cst_95 = arith.constant 5.000000e-01 : f32
    %240 = vector.broadcast %cst_95 : f32 to vector<16x128xf32>
    %241 = arith.mulf %240, %239 : vector<16x128xf32>
    %cst_96 = arith.constant 5.000000e-01 : f32
    %242 = vector.broadcast %cst_96 : f32 to vector<16x128xf32>
    %243 = arith.addf %241, %242 : vector<16x128xf32>
    %244 = vector.extract_strided_slice %227 {offsets = [0, 256], sizes = [16, 128], strides = [1, 1]} : vector<16x512xf32> to vector<16x128xf32>
    %245 = math.tanh %244 : vector<16x128xf32>
    %246 = vector.extract_strided_slice %227 {offsets = [0, 384], sizes = [16, 128], strides = [1, 1]} : vector<16x512xf32> to vector<16x128xf32>
    %cst_97 = arith.constant 5.000000e-01 : f32
    %247 = vector.broadcast %cst_97 : f32 to vector<16x128xf32>
    %248 = arith.mulf %247, %246 : vector<16x128xf32>
    %249 = math.tanh %248 : vector<16x128xf32>
    %cst_98 = arith.constant 5.000000e-01 : f32
    %250 = vector.broadcast %cst_98 : f32 to vector<16x128xf32>
    %251 = arith.mulf %250, %249 : vector<16x128xf32>
    %cst_99 = arith.constant 5.000000e-01 : f32
    %252 = vector.broadcast %cst_99 : f32 to vector<16x128xf32>
    %253 = arith.addf %251, %252 : vector<16x128xf32>
    %254 = arith.mulf %243, %213 : vector<16x128xf32>
    %255 = arith.mulf %235, %245 : vector<16x128xf32>
    %256 = arith.addf %254, %255 : vector<16x128xf32>
    %257 = math.tanh %256 : vector<16x128xf32>
    %258 = arith.mulf %253, %257 : vector<16x128xf32>
    %259 = arith.truncf %258 : vector<16x128xf32> to vector<16x128xbf16>
    %c5_100 = arith.constant 5 : index
    %c0_101 = arith.constant 0 : index
    %c0_102 = arith.constant 0 : index
    %260 = vector.load %arg5[%c5_100, %c0_101, %c0_102] : memref<8x16x128xbf16, #tpu.memory_space<vmem>>, vector<1x16x128xbf16>
    %261 = vector.shape_cast %260 : vector<1x16x128xbf16> to vector<16x128xbf16>
    %262 = vector.shape_cast %259 : vector<16x128xbf16> to vector<1x16x128xbf16>
    tpu.vector_store %arg5[%c5_100, %c0_101, %c0_102], %262 {strides = array<i32>} : memref<8x16x128xbf16, #tpu.memory_space<vmem>>, vector<1x16x128xbf16>,
    %c6 = arith.constant 6 : index
    %c0_103 = arith.constant 0 : index
    %c0_104 = arith.constant 0 : index
    %263 = vector.load %arg1[%c6, %c0_103, %c0_104] : memref<8x16x16xf32, #tpu.memory_space<vmem>>, vector<1x16x16xf32>
    %264 = vector.shape_cast %263 : vector<1x16x16xf32> to vector<16x16xf32>
    %cst_105 = arith.constant dense<0.000000e+00> : vector<16x512xf32>
    %265 = tpu.matmul %264, %0, %cst_105 {dimension_numbers = #tpu.dot_dimension_numbers<[1], [0], [0], [1], [0, 0, 1, 1], [], []>} : vector<16x16xf32>, vector<16x512xf32>, vector<16x512xf32> -> vector<16x512xf32>
    %266 = vector.broadcast %2 : vector<1x512xf32> to vector<16x512xf32>
    %267 = arith.addf %265, %266 : vector<16x512xf32>
    %268 = arith.truncf %258 : vector<16x128xf32> to vector<16x128xbf16>
    %cst_106 = arith.constant dense<0.000000e+00> : vector<16x512xf32>
    %269 = tpu.matmul %268, %1, %cst_106 {dimension_numbers = #tpu.dot_dimension_numbers<[1], [0], [0], [1], [0, 0, 1, 1], [], []>} : vector<16x128xbf16>, vector<128x512xbf16>, vector<16x512xf32> -> vector<16x512xf32>
    %270 = arith.addf %267, %269 : vector<16x512xf32>
    %271 = vector.extract_strided_slice %270 {offsets = [0, 0], sizes = [16, 128], strides = [1, 1]} : vector<16x512xf32> to vector<16x128xf32>
    %cst_107 = arith.constant 5.000000e-01 : f32
    %272 = vector.broadcast %cst_107 : f32 to vector<16x128xf32>
    %273 = arith.mulf %272, %271 : vector<16x128xf32>
    %274 = math.tanh %273 : vector<16x128xf32>
    %cst_108 = arith.constant 5.000000e-01 : f32
    %275 = vector.broadcast %cst_108 : f32 to vector<16x128xf32>
    %276 = arith.mulf %275, %274 : vector<16x128xf32>
    %cst_109 = arith.constant 5.000000e-01 : f32
    %277 = vector.broadcast %cst_109 : f32 to vector<16x128xf32>
    %278 = arith.addf %276, %277 : vector<16x128xf32>
    %279 = vector.extract_strided_slice %270 {offsets = [0, 128], sizes = [16, 128], strides = [1, 1]} : vector<16x512xf32> to vector<16x128xf32>
    %cst_110 = arith.constant 5.000000e-01 : f32
    %280 = vector.broadcast %cst_110 : f32 to vector<16x128xf32>
    %281 = arith.mulf %280, %279 : vector<16x128xf32>
    %282 = math.tanh %281 : vector<16x128xf32>
    %cst_111 = arith.constant 5.000000e-01 : f32
    %283 = vector.broadcast %cst_111 : f32 to vector<16x128xf32>
    %284 = arith.mulf %283, %282 : vector<16x128xf32>
    %cst_112 = arith.constant 5.000000e-01 : f32
    %285 = vector.broadcast %cst_112 : f32 to vector<16x128xf32>
    %286 = arith.addf %284, %285 : vector<16x128xf32>
    %287 = vector.extract_strided_slice %270 {offsets = [0, 256], sizes = [16, 128], strides = [1, 1]} : vector<16x512xf32> to vector<16x128xf32>
    %288 = math.tanh %287 : vector<16x128xf32>
    %289 = vector.extract_strided_slice %270 {offsets = [0, 384], sizes = [16, 128], strides = [1, 1]} : vector<16x512xf32> to vector<16x128xf32>
    %cst_113 = arith.constant 5.000000e-01 : f32
    %290 = vector.broadcast %cst_113 : f32 to vector<16x128xf32>
    %291 = arith.mulf %290, %289 : vector<16x128xf32>
    %292 = math.tanh %291 : vector<16x128xf32>
    %cst_114 = arith.constant 5.000000e-01 : f32
    %293 = vector.broadcast %cst_114 : f32 to vector<16x128xf32>
    %294 = arith.mulf %293, %292 : vector<16x128xf32>
    %cst_115 = arith.constant 5.000000e-01 : f32
    %295 = vector.broadcast %cst_115 : f32 to vector<16x128xf32>
    %296 = arith.addf %294, %295 : vector<16x128xf32>
    %297 = arith.mulf %286, %256 : vector<16x128xf32>
    %298 = arith.mulf %278, %288 : vector<16x128xf32>
    %299 = arith.addf %297, %298 : vector<16x128xf32>
    %300 = math.tanh %299 : vector<16x128xf32>
    %301 = arith.mulf %296, %300 : vector<16x128xf32>
    %302 = arith.truncf %301 : vector<16x128xf32> to vector<16x128xbf16>
    %c6_116 = arith.constant 6 : index
    %c0_117 = arith.constant 0 : index
    %c0_118 = arith.constant 0 : index
    %303 = vector.load %arg5[%c6_116, %c0_117, %c0_118] : memref<8x16x128xbf16, #tpu.memory_space<vmem>>, vector<1x16x128xbf16>
    %304 = vector.shape_cast %303 : vector<1x16x128xbf16> to vector<16x128xbf16>
    %305 = vector.shape_cast %302 : vector<16x128xbf16> to vector<1x16x128xbf16>
    tpu.vector_store %arg5[%c6_116, %c0_117, %c0_118], %305 {strides = array<i32>} : memref<8x16x128xbf16, #tpu.memory_space<vmem>>, vector<1x16x128xbf16>,
    %c7 = arith.constant 7 : index
    %c0_119 = arith.constant 0 : index
    %c0_120 = arith.constant 0 : index
    %306 = vector.load %arg1[%c7, %c0_119, %c0_120] : memref<8x16x16xf32, #tpu.memory_space<vmem>>, vector<1x16x16xf32>
    %307 = vector.shape_cast %306 : vector<1x16x16xf32> to vector<16x16xf32>
    %cst_121 = arith.constant dense<0.000000e+00> : vector<16x512xf32>
    %308 = tpu.matmul %307, %0, %cst_121 {dimension_numbers = #tpu.dot_dimension_numbers<[1], [0], [0], [1], [0, 0, 1, 1], [], []>} : vector<16x16xf32>, vector<16x512xf32>, vector<16x512xf32> -> vector<16x512xf32>
    %309 = vector.broadcast %2 : vector<1x512xf32> to vector<16x512xf32>
    %310 = arith.addf %308, %309 : vector<16x512xf32>
    %311 = arith.truncf %301 : vector<16x128xf32> to vector<16x128xbf16>
    %cst_122 = arith.constant dense<0.000000e+00> : vector<16x512xf32>
    %312 = tpu.matmul %311, %1, %cst_122 {dimension_numbers = #tpu.dot_dimension_numbers<[1], [0], [0], [1], [0, 0, 1, 1], [], []>} : vector<16x128xbf16>, vector<128x512xbf16>, vector<16x512xf32> -> vector<16x512xf32>
    %313 = arith.addf %310, %312 : vector<16x512xf32>
    %314 = vector.extract_strided_slice %313 {offsets = [0, 0], sizes = [16, 128], strides = [1, 1]} : vector<16x512xf32> to vector<16x128xf32>
    %cst_123 = arith.constant 5.000000e-01 : f32
    %315 = vector.broadcast %cst_123 : f32 to vector<16x128xf32>
    %316 = arith.mulf %315, %314 : vector<16x128xf32>
    %317 = math.tanh %316 : vector<16x128xf32>
    %cst_124 = arith.constant 5.000000e-01 : f32
    %318 = vector.broadcast %cst_124 : f32 to vector<16x128xf32>
    %319 = arith.mulf %318, %317 : vector<16x128xf32>
    %cst_125 = arith.constant 5.000000e-01 : f32
    %320 = vector.broadcast %cst_125 : f32 to vector<16x128xf32>
    %321 = arith.addf %319, %320 : vector<16x128xf32>
    %322 = vector.extract_strided_slice %313 {offsets = [0, 128], sizes = [16, 128], strides = [1, 1]} : vector<16x512xf32> to vector<16x128xf32>
    %cst_126 = arith.constant 5.000000e-01 : f32
    %323 = vector.broadcast %cst_126 : f32 to vector<16x128xf32>
    %324 = arith.mulf %323, %322 : vector<16x128xf32>
    %325 = math.tanh %324 : vector<16x128xf32>
    %cst_127 = arith.constant 5.000000e-01 : f32
    %326 = vector.broadcast %cst_127 : f32 to vector<16x128xf32>
    %327 = arith.mulf %326, %325 : vector<16x128xf32>
    %cst_128 = arith.constant 5.000000e-01 : f32
    %328 = vector.broadcast %cst_128 : f32 to vector<16x128xf32>
    %329 = arith.addf %327, %328 : vector<16x128xf32>
    %330 = vector.extract_strided_slice %313 {offsets = [0, 256], sizes = [16, 128], strides = [1, 1]} : vector<16x512xf32> to vector<16x128xf32>
    %331 = math.tanh %330 : vector<16x128xf32>
    %332 = vector.extract_strided_slice %313 {offsets = [0, 384], sizes = [16, 128], strides = [1, 1]} : vector<16x512xf32> to vector<16x128xf32>
    %cst_129 = arith.constant 5.000000e-01 : f32
    %333 = vector.broadcast %cst_129 : f32 to vector<16x128xf32>
    %334 = arith.mulf %333, %332 : vector<16x128xf32>
    %335 = math.tanh %334 : vector<16x128xf32>
    %cst_130 = arith.constant 5.000000e-01 : f32
    %336 = vector.broadcast %cst_130 : f32 to vector<16x128xf32>
    %337 = arith.mulf %336, %335 : vector<16x128xf32>
    %cst_131 = arith.constant 5.000000e-01 : f32
    %338 = vector.broadcast %cst_131 : f32 to vector<16x128xf32>
    %339 = arith.addf %337, %338 : vector<16x128xf32>
    %340 = arith.mulf %329, %299 : vector<16x128xf32>
    %341 = arith.mulf %321, %331 : vector<16x128xf32>
    %342 = arith.addf %340, %341 : vector<16x128xf32>
    %343 = math.tanh %342 : vector<16x128xf32>
    %344 = arith.mulf %339, %343 : vector<16x128xf32>
    %345 = arith.truncf %344 : vector<16x128xf32> to vector<16x128xbf16>
    %c7_132 = arith.constant 7 : index
    %c0_133 = arith.constant 0 : index
    %c0_134 = arith.constant 0 : index
    %346 = vector.load %arg5[%c7_132, %c0_133, %c0_134] : memref<8x16x128xbf16, #tpu.memory_space<vmem>>, vector<1x16x128xbf16>
    %347 = vector.shape_cast %346 : vector<1x16x128xbf16> to vector<16x128xbf16>
    %348 = vector.shape_cast %345 : vector<16x128xbf16> to vector<1x16x128xbf16>
    tpu.vector_store %arg5[%c7_132, %c0_133, %c0_134], %348 {strides = array<i32>} : memref<8x16x128xbf16, #tpu.memory_space<vmem>>, vector<1x16x128xbf16>,
    return
  }
  func.func @transform_0(%arg0: i32) -> (i32, i32, i32) {
    %c0_i32 = arith.constant 0 : i32
    %c0_i32_0 = arith.constant 0 : i32
    %c0_i32_1 = arith.constant 0 : i32
    return %c0_i32, %arg0, %c0_i32_0 : i32, i32, i32
  }
  func.func @transform_1(%arg0: i32) -> (i32, i32) {
    %c0_i32 = arith.constant 0 : i32
    %c0_i32_0 = arith.constant 0 : i32
    %c0_i32_1 = arith.constant 0 : i32
    return %c0_i32, %c0_i32_0 : i32, i32
  }
  func.func @transform_2(%arg0: i32) -> (i32, i32) {
    %c0_i32 = arith.constant 0 : i32
    %c0_i32_0 = arith.constant 0 : i32
    %c0_i32_1 = arith.constant 0 : i32
    return %c0_i32, %c0_i32_0 : i32, i32
  }
  func.func @transform_3(%arg0: i32) -> (i32, i32) {
    %c0_i32 = arith.constant 0 : i32
    %c0_i32_0 = arith.constant 0 : i32
    %c0_i32_1 = arith.constant 0 : i32
    return %c0_i32, %c0_i32_0 : i32, i32
  }
  func.func @transform_4(%arg0: i32) -> (i32, i32, i32) {
    %c0_i32 = arith.constant 0 : i32
    %c0_i32_0 = arith.constant 0 : i32
    %c0_i32_1 = arith.constant 0 : i32
    return %c0_i32, %arg0, %c0_i32_0 : i32, i32, i32
  }
}

</mosaic_0001>

<llo_original>
// kernel: tpu_custom_call.1
$region0: #{tpu_custom_call.1}
  #allocation0 [shape = 'u32[]', space=smem, size = 0x4, offset = 0x4, fixed_abs, tag = 'smem constant byte address 0x4 - core index']
  #allocation1 [shape = 'u32[72,128]{1,0:T(1,128)}', space=vmem, size = 0x9000, scoped, tag = 'internal scratch']
  %s0 = inlined_call_operand.hbm [shape: f32[8,16,16], index: 0, kind: input, shape index: {}]
  %s1 = inlined_call_operand.hbm [shape: f32[16,512], index: 1, kind: input, shape index: {}]
  %s2 = inlined_call_operand.hbm [shape: bf16[128,512], index: 2, kind: input, shape index: {}]
  %s3 = inlined_call_operand.hbm [shape: f32[1,512], index: 3, kind: input, shape index: {}]
  %s4 = inlined_call_operand.hbm [shape: bf16[8,16,128], index: 4, kind: output, shape index: {}]
  %s5 = sld [smem:[#allocation0]]
  $region42: #{tpu_custom_call.1} parent=0
    _
  %s7 = ssub.s32 1, %s5
  %s8 = scalar_select 0, %s7, %s5
  $region1: #{tpu_custom_call.1} parent=0
    #allocation2 [shape = 'u8[65536]{0}', space=vmem, size = 0x10000, scoped, tag = 'input window, operand 0, single buffered']
    #allocation3 [shape = 's32[1]{0}', space=sflag, size = 0x4, scoped, tag = 'scoped memory for tpu_custom_call.1']
    #allocation4 [shape = 's32[1]{0}', space=sflag, size = 0x4, scoped, tag = 'scoped memory for tpu_custom_call.1']
    #allocation5 [shape = 'u8[32768]{0}', space=vmem, size = 0x8000, scoped, tag = 'input window, operand 1, single buffered']
    #allocation6 [shape = 's32[1]{0}', space=sflag, size = 0x4, scoped, tag = 'scoped memory for tpu_custom_call.1']
    #allocation7 [shape = 'u8[131072]{0}', space=vmem, size = 0x20000, scoped, tag = 'input window, operand 2, single buffered']
    #allocation8 [shape = 'u8[2048]{0}', space=vmem, size = 0x800, scoped, tag = 'input window, operand 3, single buffered']
    #allocation9 [shape = 's32[1]{0}', space=sflag, size = 0x4, scoped, tag = 'scoped memory for tpu_custom_call.1']
    #allocation10 [shape = 'u8[32768]{0}', space=vmem, size = 0x8000, scoped, tag = 'output window, operand 0, single buffered']
    %9 = vsyncpa [#allocation3], 0
    %10 = vsyncpa [#allocation6], 0
    %11 = vsyncpa [#allocation9], 0
    %12 = vsyncpa [#allocation4], 0
    // Predicated region
    $region2: #{tpu_custom_call.1} parent=1 // pred_check
      _
    $region3: #{tpu_custom_call.1} parent=1 // pred_check_branch
      %14 = sbr.rel (0) target = $region5
    $region4: #{tpu_custom_call.1} parent=1 // pred_region
      %16 = vsyncadd [#allocation3], 0
      %s17 = sshll.u32 %s0, 4
      %s18 = int_to_ptr.hbm [resolvable:$true] %s17
      %s19 = sshll.u32 [#allocation2], 4
      %s20 = int_to_ptr.vmem [resolvable:$true] %s19
      %25 = dma.hbm_to_vmem [thread:$0]  %s18, 2048, %s20, [#allocation3], 128, 128, 8
    $region5: #{tpu_custom_call.1} parent=1 // pred_fallthru
      _
    // Predicated region
    $region6: #{tpu_custom_call.1} parent=1 // pred_check
      _
    $region7: #{tpu_custom_call.1} parent=1 // pred_check_branch
      %27 = sbr.rel (0) target = $region9
    $region8: #{tpu_custom_call.1} parent=1 // pred_region
      %29 = vsyncadd [#allocation6], 0
      %s30 = sshll.u32 %s1, 4
      %s31 = int_to_ptr.hbm [resolvable:$true] %s30
      %s32 = sshll.u32 [#allocation5], 4
      %s33 = int_to_ptr.vmem [resolvable:$true] %s32
      %38 = dma.hbm_to_vmem [thread:$0]  %s31, 1024, %s33, [#allocation6], 512, 512, 32
    $region9: #{tpu_custom_call.1} parent=1 // pred_fallthru
      _
    // Predicated region
    $region10: #{tpu_custom_call.1} parent=1 // pred_check
      _
    $region11: #{tpu_custom_call.1} parent=1 // pred_check_branch
      %40 = sbr.rel (0) target = $region13
    $region12: #{tpu_custom_call.1} parent=1 // pred_region
      %42 = vsyncadd [#allocation6], 0
      %s43 = sshll.u32 %s2, 4
      %s44 = int_to_ptr.hbm [resolvable:$true] %s43
      %s45 = sshll.u32 [#allocation7], 4
      %s46 = int_to_ptr.vmem [resolvable:$true] %s45
      %51 = dma.hbm_to_vmem [thread:$0]  %s44, 4096, %s46, [#allocation6], 256, 256, 16
    $region13: #{tpu_custom_call.1} parent=1 // pred_fallthru
      _
    // Predicated region
    $region14: #{tpu_custom_call.1} parent=1 // pred_check
      _
    $region15: #{tpu_custom_call.1} parent=1 // pred_check_branch
      %53 = sbr.rel (0) target = $region17
    $region16: #{tpu_custom_call.1} parent=1 // pred_region
      %55 = vsyncadd [#allocation9], 0
      %s57 = sshll.u32 %s3, 4
      %s58 = int_to_ptr.hbm [resolvable:$true] %s57
      %s59 = sshll.u32 [#allocation8], 4
      %s60 = int_to_ptr.vmem [resolvable:$true] %s59
      %62 = dma.hbm_to_vmem [thread:$0]  %s58, 64, %s60, [#allocation9]
    $region17: #{tpu_custom_call.1} parent=1 // pred_fallthru
      _
    // Predicated region
    $region18: #{tpu_custom_call.1} parent=1 // pred_check
      _
    $region19: #{tpu_custom_call.1} parent=1 // pred_check_branch
      %64 = sbr.rel (0) target = $region21
    $region20: #{tpu_custom_call.1} parent=1 // pred_region
      %66 = dma.done [#allocation3], 2048
    $region21: #{tpu_custom_call.1} parent=1 // pred_fallthru
      _
    // Predicated region
    $region22: #{tpu_custom_call.1} parent=1 // pred_check
      _
    $region23: #{tpu_custom_call.1} parent=1 // pred_check_branch
      %68 = sbr.rel (0) target = $region25
    $region24: #{tpu_custom_call.1} parent=1 // pred_region
      %70 = dma.done [#allocation6], 1024
    $region25: #{tpu_custom_call.1} parent=1 // pred_fallthru
      _
    // Predicated region
    $region26: #{tpu_custom_call.1} parent=1 // pred_check
      _
    $region27: #{tpu_custom_call.1} parent=1 // pred_check_branch
      %72 = sbr.rel (0) target = $region29
    $region28: #{tpu_custom_call.1} parent=1 // pred_region
      %74 = dma.done [#allocation6], 4096
    $region29: #{tpu_custom_call.1} parent=1 // pred_fallthru
      _
    // Predicated region
    $region30: #{tpu_custom_call.1} parent=1 // pred_check
      _
    $region31: #{tpu_custom_call.1} parent=1 // pred_check_branch
      %76 = sbr.rel (0) target = $region33
    $region32: #{tpu_custom_call.1} parent=1 // pred_region
      %78 = dma.done [#allocation9], 64
    $region33: #{tpu_custom_call.1} parent=1 // pred_fallthru
      _
    %v80 = vld [vmem:[#allocation5] sm:$0xff]
    %v81 = vld [vmem:[#allocation5 + $0x8] sm:$0xff]
    %v82 = vld [vmem:[#allocation5 + $0x10] sm:$0xff]
    %v83 = vld [vmem:[#allocation5 + $0x18] sm:$0xff]
    %v84 = vld [vmem:[#allocation5 + $0x20] sm:$0xff]
    %v85 = vld [vmem:[#allocation5 + $0x28] sm:$0xff]
    %v86 = vld [vmem:[#allocation5 + $0x30] sm:$0xff]
    %v87 = vld [vmem:[#allocation5 + $0x38] sm:$0xff]
    %v88 = vld [vmem:[#allocation7] sm:$0xff]
    %v89 = vld [vmem:[#allocation7 + $0x8] sm:$0xff]
    %v90 = vld [vmem:[#allocation7 + $0x10] sm:$0xff]
    %v91 = vld [vmem:[#allocation7 + $0x18] sm:$0xff]
    %v92 = vld [vmem:[#allocation7 + $0x20] sm:$0xff]
    %v93 = vld [vmem:[#allocation7 + $0x28] sm:$0xff]
    %v94 = vld [vmem:[#allocation7 + $0x30] sm:$0xff]
    %v95 = vld [vmem:[#allocation7 + $0x38] sm:$0xff]
    %v96 = vld [vmem:[#allocation7 + $0x40] sm:$0xff]
    %v97 = vld [vmem:[#allocation7 + $0x48] sm:$0xff]
    %v98 = vld [vmem:[#allocation7 + $0x50] sm:$0xff]
    %v99 = vld [vmem:[#allocation7 + $0x58] sm:$0xff]
    %v100 = vld [vmem:[#allocation7 + $0x60] sm:$0xff]
    %v101 = vld [vmem:[#allocation7 + $0x68] sm:$0xff]
    %v102 = vld [vmem:[#allocation7 + $0x70] sm:$0xff]
    %v103 = vld [vmem:[#allocation7 + $0x78] sm:$0xff]
    %v104 = vld [vmem:[#allocation7 + $0x80] sm:$0xff]
    %v105 = vld [vmem:[#allocation7 + $0x88] sm:$0xff]
    %v106 = vld [vmem:[#allocation7 + $0x90] sm:$0xff]
    %v107 = vld [vmem:[#allocation7 + $0x98] sm:$0xff]
    %v108 = vld [vmem:[#allocation7 + $0xa0] sm:$0xff]
    %v109 = vld [vmem:[#allocation7 + $0xa8] sm:$0xff]
    %v110 = vld [vmem:[#allocation7 + $0xb0] sm:$0xff]
    %v111 = vld [vmem:[#allocation7 + $0xb8] sm:$0xff]
    %v112 = vld [vmem:[#allocation7 + $0xc0] sm:$0xff]
    %v113 = vld [vmem:[#allocation7 + $0xc8] sm:$0xff]
    %v114 = vld [vmem:[#allocation7 + $0xd0] sm:$0xff]
    %v115 = vld [vmem:[#allocation7 + $0xd8] sm:$0xff]
    %v116 = vld [vmem:[#allocation7 + $0xe0] sm:$0xff]
    %v117 = vld [vmem:[#allocation7 + $0xe8] sm:$0xff]
    %v118 = vld [vmem:[#allocation7 + $0xf0] sm:$0xff]
    %v119 = vld [vmem:[#allocation7 + $0xf8] sm:$0xff]
    %v120 = vld [vmem:[#allocation8] sm:$0xf]
    %v121 = vld [vmem:[#allocation2] sm:$0xff]
    %v122 = vld [vmem:[#allocation2 + $0x8] sm:$0xff]
    %v124 = vperm.slane %v120, 0
    %v125 = vperm.slane %v120, 1
    %v126 = vperm.slane %v120, 2
    %v127 = vperm.slane %v120, 3
    %vm132 = vcmask 130048
    %v134 = vsel %vm132, %v121, 0
    %v137 = vsel %vm132, %v122, 0
    %139 = vmatpush.msra.mxu0 0.0
    %140 = vmatpush.msra.mxu0 0.0
    %141 = vmatpush.msra.mxu0 0.0
    %142 = vmatpush.msra.mxu0 0.0
    %143 = vmatpush.msra.mxu0 0.0
    %144 = vmatpush.msra.mxu0 0.0
    %145 = vmatpush.msra.mxu0 0.0
    %146 = vmatpush.msra.mxu0 0.0
    %147 = vmatpush.msra.mxu0 0.0
    %148 = vmatpush.msra.mxu0 0.0
    %149 = vmatpush.msra.mxu0 0.0
    %150 = vmatpush.msra.mxu0 0.0
    %151 = vmatpush.msra.mxu0 0.0
    %152 = vmatpush.msra.mxu0 0.0
    %153 = vmatpush.msra.mxu0 %v84
    %154 = vmatpush.msra.mxu0 %v80
    %155 = vmatmul.f32.gmra.mxu0 %v134
    %v156 = vpop.f32.mrf.mxu0
    %v157 = vadd.f32 %v124, %v156
    %158 = vmatmul.f32.gmra.mxu0 %v137
    %v159 = vpop.f32.mrf.mxu0
    %v160 = vadd.f32 %v124, %v159
    %161 = vdwg.mxu0
    %162 = vmatpush.msra.mxu0 0.0
    %163 = vmatpush.msra.mxu0 0.0
    %164 = vmatpush.msra.mxu0 0.0
    %165 = vmatpush.msra.mxu0 0.0
    %166 = vmatpush.msra.mxu0 0.0
    %167 = vmatpush.msra.mxu0 0.0
    %168 = vmatpush.msra.mxu0 0.0
    %169 = vmatpush.msra.mxu0 0.0
    %170 = vmatpush.msra.mxu0 0.0
    %171 = vmatpush.msra.mxu0 0.0
    %172 = vmatpush.msra.mxu0 0.0
    %173 = vmatpush.msra.mxu0 0.0
    %174 = vmatpush.msra.mxu0 0.0
    %175 = vmatpush.msra.mxu0 0.0
    %176 = vmatpush.msra.mxu0 %v85
    %177 = vmatpush.msra.mxu0 %v81
    %178 = vmatmul.f32.gmra.mxu0 %v134
    %v179 = vpop.f32.mrf.mxu0
    %v180 = vadd.f32 %v125, %v179
    %181 = vmatmul.f32.gmra.mxu0 %v137
    %v182 = vpop.f32.mrf.mxu0
    %v183 = vadd.f32 %v125, %v182
    %184 = vdwg.mxu0
    %185 = vmatpush.msra.mxu0 0.0
    %186 = vmatpush.msra.mxu0 0.0
    %187 = vmatpush.msra.mxu0 0.0
    %188 = vmatpush.msra.mxu0 0.0
    %189 = vmatpush.msra.mxu0 0.0
    %190 = vmatpush.msra.mxu0 0.0
    %191 = vmatpush.msra.mxu0 0.0
    %192 = vmatpush.msra.mxu0 0.0
    %193 = vmatpush.msra.mxu0 0.0
    %194 = vmatpush.msra.mxu0 0.0
    %195 = vmatpush.msra.mxu0 0.0
    %196 = vmatpush.msra.mxu0 0.0
    %197 = vmatpush.msra.mxu0 0.0
    %198 = vmatpush.msra.mxu0 0.0
    %199 = vmatpush.msra.mxu0 %v86
    %200 = vmatpush.msra.mxu0 %v82
    %201 = vmatmul.f32.gmra.mxu0 %v134
    %v202 = vpop.f32.mrf.mxu0
    %v203 = vadd.f32 %v126, %v202
    %204 = vmatmul.f32.gmra.mxu0 %v137
    %v205 = vpop.f32.mrf.mxu0
    %v206 = vadd.f32 %v126, %v205
    %207 = vdwg.mxu0
    %208 = vmatpush.msra.mxu0 0.0
    %209 = vmatpush.msra.mxu0 0.0
    %210 = vmatpush.msra.mxu0 0.0
    %211 = vmatpush.msra.mxu0 0.0
    %212 = vmatpush.msra.mxu0 0.0
    %213 = vmatpush.msra.mxu0 0.0
    %214 = vmatpush.msra.mxu0 0.0
    %215 = vmatpush.msra.mxu0 0.0
    %216 = vmatpush.msra.mxu0 0.0
    %217 = vmatpush.msra.mxu0 0.0
    %218 = vmatpush.msra.mxu0 0.0
    %219 = vmatpush.msra.mxu0 0.0
    %220 = vmatpush.msra.mxu0 0.0
    %221 = vmatpush.msra.mxu0 0.0
    %222 = vmatpush.msra.mxu0 %v87
    %223 = vmatpush.msra.mxu0 %v83
    %224 = vmatmul.f32.gmra.mxu0 %v134
    %v225 = vpop.f32.mrf.mxu0
    %v226 = vadd.f32 %v127, %v225
    %227 = vmatmul.f32.gmra.mxu0 %v137
    %v228 = vpop.f32.mrf.mxu0
    %v229 = vadd.f32 %v127, %v228
    %230 = vdwg.mxu0
    %v263 = vunpack.c.l.b16 %v88
    %v264 = vunpack.c.h.b16 %v88
    %v265 = vunpack.c.l.b16 %v89
    %v266 = vunpack.c.h.b16 %v89
    %v267 = vunpack.c.l.b16 %v90
    %v268 = vunpack.c.h.b16 %v90
    %v269 = vunpack.c.l.b16 %v91
    %v270 = vunpack.c.h.b16 %v91
    %v271 = vunpack.c.l.b16 %v92
    %v272 = vunpack.c.h.b16 %v92
    %v273 = vunpack.c.l.b16 %v93
    %v274 = vunpack.c.h.b16 %v93
    %v275 = vunpack.c.l.b16 %v94
    %v276 = vunpack.c.h.b16 %v94
    %v277 = vunpack.c.l.b16 %v95
    %v278 = vunpack.c.h.b16 %v95
    %v279 = vunpack.c.l.b16 %v96
    %v280 = vunpack.c.h.b16 %v96
    %v281 = vunpack.c.l.b16 %v97
    %v282 = vunpack.c.h.b16 %v97
    %v283 = vunpack.c.l.b16 %v98
    %v284 = vunpack.c.h.b16 %v98
    %v285 = vunpack.c.l.b16 %v99
    %v286 = vunpack.c.h.b16 %v99
    %v287 = vunpack.c.l.b16 %v100
    %v288 = vunpack.c.h.b16 %v100
    %v289 = vunpack.c.l.b16 %v101
    %v290 = vunpack.c.h.b16 %v101
    %v291 = vunpack.c.l.b16 %v102
    %v292 = vunpack.c.h.b16 %v102
    %v293 = vunpack.c.l.b16 %v103
    %v294 = vunpack.c.h.b16 %v103
    %v295 = vunpack.c.l.b16 %v104
    %v296 = vunpack.c.h.b16 %v104
    %v297 = vunpack.c.l.b16 %v105
    %v298 = vunpack.c.h.b16 %v105
    %v299 = vunpack.c.l.b16 %v106
    %v300 = vunpack.c.h.b16 %v106
    %v301 = vunpack.c.l.b16 %v107
    %v302 = vunpack.c.h.b16 %v107
    %v303 = vunpack.c.l.b16 %v108
    %v304 = vunpack.c.h.b16 %v108
    %v305 = vunpack.c.l.b16 %v109
    %v306 = vunpack.c.h.b16 %v109
    %v307 = vunpack.c.l.b16 %v110
    %v308 = vunpack.c.h.b16 %v110
    %v309 = vunpack.c.l.b16 %v111
    %v310 = vunpack.c.h.b16 %v111
    %v311 = vunpack.c.l.b16 %v112
    %v312 = vunpack.c.h.b16 %v112
    %v313 = vunpack.c.l.b16 %v113
    %v314 = vunpack.c.h.b16 %v113
    %v315 = vunpack.c.l.b16 %v114
    %v316 = vunpack.c.h.b16 %v114
    %v317 = vunpack.c.l.b16 %v115
    %v318 = vunpack.c.h.b16 %v115
    %v319 = vunpack.c.l.b16 %v116
    %v320 = vunpack.c.h.b16 %v116
    %v321 = vunpack.c.l.b16 %v117
    %v322 = vunpack.c.h.b16 %v117
    %v323 = vunpack.c.l.b16 %v118
    %v324 = vunpack.c.h.b16 %v118
    %v325 = vunpack.c.l.b16 %v119
    %v326 = vunpack.c.h.b16 %v119
    %v327 = vpack.c.b16 %v267, %v263
    %v328 = vpack.c.b16 %v268, %v264
    %v329 = vpack.c.b16 %v269, %v265
    %v330 = vpack.c.b16 %v270, %v266
    %v331 = vpack.c.b16 %v275, %v271
    %v332 = vpack.c.b16 %v276, %v272
    %v333 = vpack.c.b16 %v277, %v273
    %v334 = vpack.c.b16 %v278, %v274
    %v335 = vpack.c.b16 %v283, %v279
    %v336 = vpack.c.b16 %v284, %v280
    %v337 = vpack.c.b16 %v285, %v281
    %v338 = vpack.c.b16 %v286, %v282
    %v339 = vpack.c.b16 %v291, %v287
    %v340 = vpack.c.b16 %v292, %v288
    %v341 = vpack.c.b16 %v293, %v289
    %v342 = vpack.c.b16 %v294, %v290
    %v343 = vpack.c.b16 %v299, %v295
    %v344 = vpack.c.b16 %v300, %v296
    %v345 = vpack.c.b16 %v301, %v297
    %v346 = vpack.c.b16 %v302, %v298
    %v347 = vpack.c.b16 %v307, %v303
    %v348 = vpack.c.b16 %v308, %v304
    %v349 = vpack.c.b16 %v309, %v305
    %v350 = vpack.c.b16 %v310, %v306
    %v351 = vpack.c.b16 %v315, %v311
    %v352 = vpack.c.b16 %v316, %v312
    %v353 = vpack.c.b16 %v317, %v313
    %v354 = vpack.c.b16 %v318, %v314
    %v355 = vpack.c.b16 %v323, %v319
    %v356 = vpack.c.b16 %v324, %v320
    %v357 = vpack.c.b16 %v325, %v321
    %v358 = vpack.c.b16 %v326, %v322
    %391 = vmatpush.bf16.msra.mxu0 %v355
    %392 = vmatpush.bf16.msra.mxu0 %v351
    %393 = vmatpush.bf16.msra.mxu0 %v347
    %394 = vmatpush.bf16.msra.mxu0 %v343
    %395 = vmatpush.bf16.msra.mxu0 %v339
    %396 = vmatpush.bf16.msra.mxu0 %v335
    %397 = vmatpush.bf16.msra.mxu0 %v331
    %398 = vmatpush.bf16.msra.mxu0 %v327
    %399 = vmatmul.bf16.gmra.mxu0 0
    %v400 = vpop.f32.mrf.mxu0
    %v401 = vadd.f32 0.0, %v400
    %v402 = vpop.f32.mrf.mxu0
    %v403 = vadd.f32 0.0, %v402
    %404 = vdwg.mxu0
    %405 = vmatpush.bf16.msra.mxu0 %v356
    %406 = vmatpush.bf16.msra.mxu0 %v352
    %407 = vmatpush.bf16.msra.mxu0 %v348
    %408 = vmatpush.bf16.msra.mxu0 %v344
    %409 = vmatpush.bf16.msra.mxu0 %v340
    %410 = vmatpush.bf16.msra.mxu0 %v336
    %411 = vmatpush.bf16.msra.mxu0 %v332
    %412 = vmatpush.bf16.msra.mxu0 %v328
    %413 = vmatmul.bf16.gmra.mxu0 0
    %v414 = vpop.f32.mrf.mxu0
    %v415 = vadd.f32 0.0, %v414
    %v416 = vpop.f32.mrf.mxu0
    %v417 = vadd.f32 0.0, %v416
    %418 = vdwg.mxu0
    %419 = vmatpush.bf16.msra.mxu0 %v357
    %420 = vmatpush.bf16.msra.mxu0 %v353
    %421 = vmatpush.bf16.msra.mxu0 %v349
    %422 = vmatpush.bf16.msra.mxu0 %v345
    %423 = vmatpush.bf16.msra.mxu0 %v341
    %424 = vmatpush.bf16.msra.mxu0 %v337
    %425 = vmatpush.bf16.msra.mxu0 %v333
    %426 = vmatpush.bf16.msra.mxu0 %v329
    %427 = vmatmul.bf16.gmra.mxu0 0
    %v428 = vpop.f32.mrf.mxu0
    %v429 = vadd.f32 0.0, %v428
    %v430 = vpop.f32.mrf.mxu0
    %v431 = vadd.f32 0.0, %v430
    %432 = vdwg.mxu0
    %433 = vmatpush.bf16.msra.mxu0 %v358
    %434 = vmatpush.bf16.msra.mxu0 %v354
    %435 = vmatpush.bf16.msra.mxu0 %v350
    %436 = vmatpush.bf16.msra.mxu0 %v346
    %437 = vmatpush.bf16.msra.mxu0 %v342
    %438 = vmatpush.bf16.msra.mxu0 %v338
    %439 = vmatpush.bf16.msra.mxu0 %v334
    %440 = vmatpush.bf16.msra.mxu0 %v330
    %441 = vmatmul.bf16.gmra.mxu0 0
    %v442 = vpop.f32.mrf.mxu0
    %v443 = vadd.f32 0.0, %v442
    %v444 = vpop.f32.mrf.mxu0
    %v445 = vadd.f32 0.0, %v444
    %446 = vdwg.mxu0
    %v447 = vadd.f32 %v157, %v401
    %v448 = vadd.f32 %v180, %v415
    %v449 = vadd.f32 %v203, %v429
    %v450 = vadd.f32 %v226, %v443
    %v451 = vadd.f32 %v160, %v403
    %v452 = vadd.f32 %v183, %v417
    %v453 = vadd.f32 %v206, %v431
    %v454 = vadd.f32 %v229, %v445
    %v455 = vmul.f32 %v447, 0.5
    %v456 = vmul.f32 %v451, 0.5
    %v457 = vtanh.pop %v455
    %v458 = vtanh.pop %v456
    %v459 = vmul.f32 %v457, 0.5
    %v460 = vmul.f32 %v458, 0.5
    %v461 = vadd.f32 %v459, 0.5
    %v462 = vadd.f32 %v460, 0.5
    %v463 = vmul.f32 %v448, 0.5
    %v464 = vmul.f32 %v452, 0.5
    %v465 = vtanh.pop %v463
    %v466 = vtanh.pop %v464
    %v467 = vmul.f32 %v465, 0.5
    %v468 = vmul.f32 %v466, 0.5
    %v469 = vadd.f32 %v467, 0.5
    %v470 = vadd.f32 %v468, 0.5
    %v471 = vtanh.pop %v449
    %v472 = vtanh.pop %v453
    %v473 = vmul.f32 %v450, 0.5
    %v474 = vmul.f32 %v454, 0.5
    %v475 = vtanh.pop %v473
    %v476 = vtanh.pop %v474
    %v477 = vmul.f32 %v475, 0.5
    %v478 = vmul.f32 %v476, 0.5
    %v479 = vadd.f32 %v477, 0.5
    %v480 = vadd.f32 %v478, 0.5
    %v481 = vmul.f32 %v469, 0.0
    %v482 = vmul.f32 %v470, 0.0
    %v483 = vmul.f32 %v461, %v471
    %v484 = vmul.f32 %v462, %v472
    %v485 = vadd.f32 %v481, %v483
    %v486 = vadd.f32 %v482, %v484
    %v487 = vtanh.pop %v485
    %v488 = vtanh.pop %v486
    %v489 = vmul.f32 %v479, %v487
    %v490 = vmul.f32 %v480, %v488
    %v491 = vpack.c.bf16 %v489, %v489
    %v492 = vpack.c.bf16 %v490, %v490
    %493 = vst [vmem:[#allocation10] sm:$0xf] %v491
    %494 = vst [vmem:[#allocation10 + $0x4] sm:$0xf] %v492
    %s495 = scalar_lea.vmem [#allocation2], 16
    %v496 = vld [vmem:[%s495] sm:$0xff]
    %v497 = vld [vmem:[%s495 + $0x8] sm:$0xff]
    %v499 = vsel %vm132, %v496, 0
    %v502 = vsel %vm132, %v497, 0
    %504 = vmatpush.msra.mxu0 0.0
    %505 = vmatpush.msra.mxu0 0.0
    %506 = vmatpush.msra.mxu0 0.0
    %507 = vmatpush.msra.mxu0 0.0
    %508 = vmatpush.msra.mxu0 0.0
    %509 = vmatpush.msra.mxu0 0.0
    %510 = vmatpush.msra.mxu0 0.0
    %511 = vmatpush.msra.mxu0 0.0
    %512 = vmatpush.msra.mxu0 0.0
    %513 = vmatpush.msra.mxu0 0.0
    %514 = vmatpush.msra.mxu0 0.0
    %515 = vmatpush.msra.mxu0 0.0
    %516 = vmatpush.msra.mxu0 0.0
    %517 = vmatpush.msra.mxu0 0.0
    %518 = vmatpush.msra.mxu0 %v84
    %519 = vmatpush.msra.mxu0 %v80
    %520 = vmatmul.f32.gmra.mxu0 %v499
    %v521 = vpop.f32.mrf.mxu0
    %v522 = vadd.f32 %v124, %v521
    %523 = vmatmul.f32.gmra.mxu0 %v502
    %v524 = vpop.f32.mrf.mxu0
    %v525 = vadd.f32 %v124, %v524
    %526 = vdwg.mxu0
    %527 = vmatpush.msra.mxu0 0.0
    %528 = vmatpush.msra.mxu0 0.0
    %529 = vmatpush.msra.mxu0 0.0
    %530 = vmatpush.msra.mxu0 0.0
    %531 = vmatpush.msra.mxu0 0.0
    %532 = vmatpush.msra.mxu0 0.0
    %533 = vmatpush.msra.mxu0 0.0
    %534 = vmatpush.msra.mxu0 0.0
    %535 = vmatpush.msra.mxu0 0.0
    %536 = vmatpush.msra.mxu0 0.0
    %537 = vmatpush.msra.mxu0 0.0
    %538 = vmatpush.msra.mxu0 0.0
    %539 = vmatpush.msra.mxu0 0.0
    %540 = vmatpush.msra.mxu0 0.0
    %541 = vmatpush.msra.mxu0 %v85
    %542 = vmatpush.msra.mxu0 %v81
    %543 = vmatmul.f32.gmra.mxu0 %v499
    %v544 = vpop.f32.mrf.mxu0
    %v545 = vadd.f32 %v125, %v544
    %546 = vmatmul.f32.gmra.mxu0 %v502
    %v547 = vpop.f32.mrf.mxu0
    %v548 = vadd.f32 %v125, %v547
    %549 = vdwg.mxu0
    %550 = vmatpush.msra.mxu0 0.0
    %551 = vmatpush.msra.mxu0 0.0
    %552 = vmatpush.msra.mxu0 0.0
    %553 = vmatpush.msra.mxu0 0.0
    %554 = vmatpush.msra.mxu0 0.0
    %555 = vmatpush.msra.mxu0 0.0
    %556 = vmatpush.msra.mxu0 0.0
    %557 = vmatpush.msra.mxu0 0.0
    %558 = vmatpush.msra.mxu0 0.0
    %559 = vmatpush.msra.mxu0 0.0
    %560 = vmatpush.msra.mxu0 0.0
    %561 = vmatpush.msra.mxu0 0.0
    %562 = vmatpush.msra.mxu0 0.0
    %563 = vmatpush.msra.mxu0 0.0
    %564 = vmatpush.msra.mxu0 %v86
    %565 = vmatpush.msra.mxu0 %v82
    %566 = vmatmul.f32.gmra.mxu0 %v499
    %v567 = vpop.f32.mrf.mxu0
    %v568 = vadd.f32 %v126, %v567
    %569 = vmatmul.f32.gmra.mxu0 %v502
    %v570 = vpop.f32.mrf.mxu0
    %v571 = vadd.f32 %v126, %v570
    %572 = vdwg.mxu0
    %573 = vmatpush.msra.mxu0 0.0
    %574 = vmatpush.msra.mxu0 0.0
    %575 = vmatpush.msra.mxu0 0.0
    %576 = vmatpush.msra.mxu0 0.0
    %577 = vmatpush.msra.mxu0 0.0
    %578 = vmatpush.msra.mxu0 0.0
    %579 = vmatpush.msra.mxu0 0.0
    %580 = vmatpush.msra.mxu0 0.0
    %581 = vmatpush.msra.mxu0 0.0
    %582 = vmatpush.msra.mxu0 0.0
    %583 = vmatpush.msra.mxu0 0.0
    %584 = vmatpush.msra.mxu0 0.0
    %585 = vmatpush.msra.mxu0 0.0
    %586 = vmatpush.msra.mxu0 0.0
    %587 = vmatpush.msra.mxu0 %v87
    %588 = vmatpush.msra.mxu0 %v83
    %589 = vmatmul.f32.gmra.mxu0 %v499
    %v590 = vpop.f32.mrf.mxu0
    %v591 = vadd.f32 %v127, %v590
    %592 = vmatmul.f32.gmra.mxu0 %v502
    %v593 = vpop.f32.mrf.mxu0
    %v594 = vadd.f32 %v127, %v593
    %595 = vdwg.mxu0
    %v598 = vunpack.c.l.b16 %v491
    %v599 = vunpack.c.l.b16 %v492
    %v600 = vpack.c.b16 %v599, %v598
    %602 = vmatpush.bf16.msra.mxu0 %v355
    %603 = vmatpush.bf16.msra.mxu0 %v351
    %604 = vmatpush.bf16.msra.mxu0 %v347
    %605 = vmatpush.bf16.msra.mxu0 %v343
    %606 = vmatpush.bf16.msra.mxu0 %v339
    %607 = vmatpush.bf16.msra.mxu0 %v335
    %608 = vmatpush.bf16.msra.mxu0 %v331
    %609 = vmatpush.bf16.msra.mxu0 %v327
    %610 = vmatmul.bf16.gmra.mxu0 %v600
    %v611 = vpop.f32.mrf.mxu0
    %v612 = vadd.f32 0.0, %v611
    %v613 = vpop.f32.mrf.mxu0
    %v614 = vadd.f32 0.0, %v613
    %615 = vdwg.mxu0
    %616 = vmatpush.bf16.msra.mxu0 %v356
    %617 = vmatpush.bf16.msra.mxu0 %v352
    %618 = vmatpush.bf16.msra.mxu0 %v348
    %619 = vmatpush.bf16.msra.mxu0 %v344
    %620 = vmatpush.bf16.msra.mxu0 %v340
    %621 = vmatpush.bf16.msra.mxu0 %v336
    %622 = vmatpush.bf16.msra.mxu0 %v332
    %623 = vmatpush.bf16.msra.mxu0 %v328
    %624 = vmatmul.bf16.gmra.mxu0 %v600
    %v625 = vpop.f32.mrf.mxu0
    %v626 = vadd.f32 0.0, %v625
    %v627 = vpop.f32.mrf.mxu0
    %v628 = vadd.f32 0.0, %v627
    %629 = vdwg.mxu0
    %630 = vmatpush.bf16.msra.mxu0 %v357
    %631 = vmatpush.bf16.msra.mxu0 %v353
    %632 = vmatpush.bf16.msra.mxu0 %v349
    %633 = vmatpush.bf16.msra.mxu0 %v345
    %634 = vmatpush.bf16.msra.mxu0 %v341
    %635 = vmatpush.bf16.msra.mxu0 %v337
    %636 = vmatpush.bf16.msra.mxu0 %v333
    %637 = vmatpush.bf16.msra.mxu0 %v329
    %638 = vmatmul.bf16.gmra.mxu0 %v600
    %v639 = vpop.f32.mrf.mxu0
    %v640 = vadd.f32 0.0, %v639
    %v641 = vpop.f32.mrf.mxu0
    %v642 = vadd.f32 0.0, %v641
    %643 = vdwg.mxu0
    %644 = vmatpush.bf16.msra.mxu0 %v358
    %645 = vmatpush.bf16.msra.mxu0 %v354
    %646 = vmatpush.bf16.msra.mxu0 %v350
    %647 = vmatpush.bf16.msra.mxu0 %v346
    %648 = vmatpush.bf16.msra.mxu0 %v342
    %649 = vmatpush.bf16.msra.mxu0 %v338
    %650 = vmatpush.bf16.msra.mxu0 %v334
    %651 = vmatpush.bf16.msra.mxu0 %v330
    %652 = vmatmul.bf16.gmra.mxu0 %v600
    %v653 = vpop.f32.mrf.mxu0
    %v654 = vadd.f32 0.0, %v653
    %v655 = vpop.f32.mrf.mxu0
    %v656 = vadd.f32 0.0, %v655
    %657 = vdwg.mxu0
    %v658 = vadd.f32 %v522, %v612
    %v659 = vadd.f32 %v545, %v626
    %v660 = vadd.f32 %v568, %v640
    %v661 = vadd.f32 %v591, %v654
    %v662 = vadd.f32 %v525, %v614
    %v663 = vadd.f32 %v548, %v628
    %v664 = vadd.f32 %v571, %v642
    %v665 = vadd.f32 %v594, %v656
    %v666 = vmul.f32 %v658, 0.5
    %v667 = vmul.f32 %v662, 0.5
    %v668 = vtanh.pop %v666
    %v669 = vtanh.pop %v667
    %v670 = vmul.f32 %v668, 0.5
    %v671 = vmul.f32 %v669, 0.5
    %v672 = vadd.f32 %v670, 0.5
    %v673 = vadd.f32 %v671, 0.5
    %v674 = vmul.f32 %v659, 0.5
    %v675 = vmul.f32 %v663, 0.5
    %v676 = vtanh.pop %v674
    %v677 = vtanh.pop %v675
    %v678 = vmul.f32 %v676, 0.5
    %v679 = vmul.f32 %v677, 0.5
    %v680 = vadd.f32 %v678, 0.5
    %v681 = vadd.f32 %v679, 0.5
    %v682 = vtanh.pop %v660
    %v683 = vtanh.pop %v664
    %v684 = vmul.f32 %v661, 0.5
    %v685 = vmul.f32 %v665, 0.5
    %v686 = vtanh.pop %v684
    %v687 = vtanh.pop %v685
    %v688 = vmul.f32 %v686, 0.5
    %v689 = vmul.f32 %v687, 0.5
    %v690 = vadd.f32 %v688, 0.5
    %v691 = vadd.f32 %v689, 0.5
    %v692 = vmul.f32 %v680, %v485
    %v693 = vmul.f32 %v681, %v486
    %v694 = vmul.f32 %v672, %v682
    %v695 = vmul.f32 %v673, %v683
    %v696 = vadd.f32 %v692, %v694
    %v697 = vadd.f32 %v693, %v695
    %v698 = vtanh.pop %v696
    %v699 = vtanh.pop %v697
    %v700 = vmul.f32 %v690, %v698
    %v701 = vmul.f32 %v691, %v699
    %v702 = vpack.c.bf16 %v700, %v700
    %v703 = vpack.c.bf16 %v701, %v701
    %s704 = scalar_lea.vmem [#allocation10], 8
    %705 = vst [vmem:[%s704] sm:$0xf] %v702
    %706 = vst [vmem:[%s704 + $0x4] sm:$0xf] %v703
    %s707 = scalar_lea.vmem [#allocation2], 32
    %v708 = vld [vmem:[%s707] sm:$0xff]
    %v709 = vld [vmem:[%s707 + $0x8] sm:$0xff]
    %v711 = vsel %vm132, %v708, 0
    %v714 = vsel %vm132, %v709, 0
    %716 = vmatpush.msra.mxu0 0.0
    %717 = vmatpush.msra.mxu0 0.0
    %718 = vmatpush.msra.mxu0 0.0
    %719 = vmatpush.msra.mxu0 0.0
    %720 = vmatpush.msra.mxu0 0.0
    %721 = vmatpush.msra.mxu0 0.0
    %722 = vmatpush.msra.mxu0 0.0
    %723 = vmatpush.msra.mxu0 0.0
    %724 = vmatpush.msra.mxu0 0.0
    %725 = vmatpush.msra.mxu0 0.0
    %726 = vmatpush.msra.mxu0 0.0
    %727 = vmatpush.msra.mxu0 0.0
    %728 = vmatpush.msra.mxu0 0.0
    %729 = vmatpush.msra.mxu0 0.0
    %730 = vmatpush.msra.mxu0 %v84
    %731 = vmatpush.msra.mxu0 %v80
    %732 = vmatmul.f32.gmra.mxu0 %v711
    %v733 = vpop.f32.mrf.mxu0
    %v734 = vadd.f32 %v124, %v733
    %735 = vmatmul.f32.gmra.mxu0 %v714
    %v736 = vpop.f32.mrf.mxu0
    %v737 = vadd.f32 %v124, %v736
    %738 = vdwg.mxu0
    %739 = vmatpush.msra.mxu0 0.0
    %740 = vmatpush.msra.mxu0 0.0
    %741 = vmatpush.msra.mxu0 0.0
    %742 = vmatpush.msra.mxu0 0.0
    %743 = vmatpush.msra.mxu0 0.0
    %744 = vmatpush.msra.mxu0 0.0
    %745 = vmatpush.msra.mxu0 0.0
    %746 = vmatpush.msra.mxu0 0.0
    %747 = vmatpush.msra.mxu0 0.0
    %748 = vmatpush.msra.mxu0 0.0
    %749 = vmatpush.msra.mxu0 0.0
    %750 = vmatpush.msra.mxu0 0.0
    %751 = vmatpush.msra.mxu0 0.0
    %752 = vmatpush.msra.mxu0 0.0
    %753 = vmatpush.msra.mxu0 %v85
    %754 = vmatpush.msra.mxu0 %v81
    %755 = vmatmul.f32.gmra.mxu0 %v711
    %v756 = vpop.f32.mrf.mxu0
    %v757 = vadd.f32 %v125, %v756
    %758 = vmatmul.f32.gmra.mxu0 %v714
    %v759 = vpop.f32.mrf.mxu0
    %v760 = vadd.f32 %v125, %v759
    %761 = vdwg.mxu0
    %762 = vmatpush.msra.mxu0 0.0
    %763 = vmatpush.msra.mxu0 0.0
    %764 = vmatpush.msra.mxu0 0.0
    %765 = vmatpush.msra.mxu0 0.0
    %766 = vmatpush.msra.mxu0 0.0
    %767 = vmatpush.msra.mxu0 0.0
    %768 = vmatpush.msra.mxu0 0.0
    %769 = vmatpush.msra.mxu0 0.0
    %770 = vmatpush.msra.mxu0 0.0
    %771 = vmatpush.msra.mxu0 0.0
    %772 = vmatpush.msra.mxu0 0.0
    %773 = vmatpush.msra.mxu0 0.0
    %774 = vmatpush.msra.mxu0 0.0
    %775 = vmatpush.msra.mxu0 0.0
    %776 = vmatpush.msra.mxu0 %v86
    %777 = vmatpush.msra.mxu0 %v82
    %778 = vmatmul.f32.gmra.mxu0 %v711
    %v779 = vpop.f32.mrf.mxu0
    %v780 = vadd.f32 %v126, %v779
    %781 = vmatmul.f32.gmra.mxu0 %v714
    %v782 = vpop.f32.mrf.mxu0
    %v783 = vadd.f32 %v126, %v782
    %784 = vdwg.mxu0
    %785 = vmatpush.msra.mxu0 0.0
    %786 = vmatpush.msra.mxu0 0.0
    %787 = vmatpush.msra.mxu0 0.0
    %788 = vmatpush.msra.mxu0 0.0
    %789 = vmatpush.msra.mxu0 0.0
    %790 = vmatpush.msra.mxu0 0.0
    %791 = vmatpush.msra.mxu0 0.0
    %792 = vmatpush.msra.mxu0 0.0
    %793 = vmatpush.msra.mxu0 0.0
    %794 = vmatpush.msra.mxu0 0.0
    %795 = vmatpush.msra.mxu0 0.0
    %796 = vmatpush.msra.mxu0 0.0
    %797 = vmatpush.msra.mxu0 0.0
    %798 = vmatpush.msra.mxu0 0.0
    %799 = vmatpush.msra.mxu0 %v87
    %800 = vmatpush.msra.mxu0 %v83
    %801 = vmatmul.f32.gmra.mxu0 %v711
    %v802 = vpop.f32.mrf.mxu0
    %v803 = vadd.f32 %v127, %v802
    %804 = vmatmul.f32.gmra.mxu0 %v714
    %v805 = vpop.f32.mrf.mxu0
    %v806 = vadd.f32 %v127, %v805
    %807 = vdwg.mxu0
    %v810 = vunpack.c.l.b16 %v702
    %v811 = vunpack.c.l.b16 %v703
    %v812 = vpack.c.b16 %v811, %v810
    %814 = vmatpush.bf16.msra.mxu0 %v355
    %815 = vmatpush.bf16.msra.mxu0 %v351
    %816 = vmatpush.bf16.msra.mxu0 %v347
    %817 = vmatpush.bf16.msra.mxu0 %v343
    %818 = vmatpush.bf16.msra.mxu0 %v339
    %819 = vmatpush.bf16.msra.mxu0 %v335
    %820 = vmatpush.bf16.msra.mxu0 %v331
    %821 = vmatpush.bf16.msra.mxu0 %v327
    %822 = vmatmul.bf16.gmra.mxu0 %v812
    %v823 = vpop.f32.mrf.mxu0
    %v824 = vadd.f32 0.0, %v823
    %v825 = vpop.f32.mrf.mxu0
    %v826 = vadd.f32 0.0, %v825
    %827 = vdwg.mxu0
    %828 = vmatpush.bf16.msra.mxu0 %v356
    %829 = vmatpush.bf16.msra.mxu0 %v352
    %830 = vmatpush.bf16.msra.mxu0 %v348
    %831 = vmatpush.bf16.msra.mxu0 %v344
    %832 = vmatpush.bf16.msra.mxu0 %v340
    %833 = vmatpush.bf16.msra.mxu0 %v336
    %834 = vmatpush.bf16.msra.mxu0 %v332
    %835 = vmatpush.bf16.msra.mxu0 %v328
    %836 = vmatmul.bf16.gmra.mxu0 %v812
    %v837 = vpop.f32.mrf.mxu0
    %v838 = vadd.f32 0.0, %v837
    %v839 = vpop.f32.mrf.mxu0
    %v840 = vadd.f32 0.0, %v839
    %841 = vdwg.mxu0
    %842 = vmatpush.bf16.msra.mxu0 %v357
    %843 = vmatpush.bf16.msra.mxu0 %v353
    %844 = vmatpush.bf16.msra.mxu0 %v349
    %845 = vmatpush.bf16.msra.mxu0 %v345
    %846 = vmatpush.bf16.msra.mxu0 %v341
    %847 = vmatpush.bf16.msra.mxu0 %v337
    %848 = vmatpush.bf16.msra.mxu0 %v333
    %849 = vmatpush.bf16.msra.mxu0 %v329
    %850 = vmatmul.bf16.gmra.mxu0 %v812
    %v851 = vpop.f32.mrf.mxu0
    %v852 = vadd.f32 0.0, %v851
    %v853 = vpop.f32.mrf.mxu0
    %v854 = vadd.f32 0.0, %v853
    %855 = vdwg.mxu0
    %856 = vmatpush.bf16.msra.mxu0 %v358
    %857 = vmatpush.bf16.msra.mxu0 %v354
    %858 = vmatpush.bf16.msra.mxu0 %v350
    %859 = vmatpush.bf16.msra.mxu0 %v346
    %860 = vmatpush.bf16.msra.mxu0 %v342
    %861 = vmatpush.bf16.msra.mxu0 %v338
    %862 = vmatpush.bf16.msra.mxu0 %v334
    %863 = vmatpush.bf16.msra.mxu0 %v330
    %864 = vmatmul.bf16.gmra.mxu0 %v812
    %v865 = vpop.f32.mrf.mxu0
    %v866 = vadd.f32 0.0, %v865
    %v867 = vpop.f32.mrf.mxu0
    %v868 = vadd.f32 0.0, %v867
    %869 = vdwg.mxu0
    %v870 = vadd.f32 %v734, %v824
    %v871 = vadd.f32 %v757, %v838
    %v872 = vadd.f32 %v780, %v852
    %v873 = vadd.f32 %v803, %v866
    %v874 = vadd.f32 %v737, %v826
    %v875 = vadd.f32 %v760, %v840
    %v876 = vadd.f32 %v783, %v854
    %v877 = vadd.f32 %v806, %v868
    %v878 = vmul.f32 %v870, 0.5
    %v879 = vmul.f32 %v874, 0.5
    %v880 = vtanh.pop %v878
    %v881 = vtanh.pop %v879
    %v882 = vmul.f32 %v880, 0.5
    %v883 = vmul.f32 %v881, 0.5
    %v884 = vadd.f32 %v882, 0.5
    %v885 = vadd.f32 %v883, 0.5
    %v886 = vmul.f32 %v871, 0.5
    %v887 = vmul.f32 %v875, 0.5
    %v888 = vtanh.pop %v886
    %v889 = vtanh.pop %v887
    %v890 = vmul.f32 %v888, 0.5
    %v891 = vmul.f32 %v889, 0.5
    %v892 = vadd.f32 %v890, 0.5
    %v893 = vadd.f32 %v891, 0.5
    %v894 = vtanh.pop %v872
    %v895 = vtanh.pop %v876
    %v896 = vmul.f32 %v873, 0.5
    %v897 = vmul.f32 %v877, 0.5
    %v898 = vtanh.pop %v896
    %v899 = vtanh.pop %v897
    %v900 = vmul.f32 %v898, 0.5
    %v901 = vmul.f32 %v899, 0.5
    %v902 = vadd.f32 %v900, 0.5
    %v903 = vadd.f32 %v901, 0.5
    %v904 = vmul.f32 %v892, %v696
    %v905 = vmul.f32 %v893, %v697
    %v906 = vmul.f32 %v884, %v894
    %v907 = vmul.f32 %v885, %v895
    %v908 = vadd.f32 %v904, %v906
    %v909 = vadd.f32 %v905, %v907
    %v910 = vtanh.pop %v908
    %v911 = vtanh.pop %v909
    %v912 = vmul.f32 %v902, %v910
    %v913 = vmul.f32 %v903, %v911
    %v914 = vpack.c.bf16 %v912, %v912
    %v915 = vpack.c.bf16 %v913, %v913
    %s916 = scalar_lea.vmem [#allocation10], 16
    %917 = vst [vmem:[%s916] sm:$0xf] %v914
    %918 = vst [vmem:[%s916 + $0x4] sm:$0xf] %v915
    %s919 = scalar_lea.vmem [#allocation2], 48
    %v920 = vld [vmem:[%s919] sm:$0xff]
    %v921 = vld [vmem:[%s919 + $0x8] sm:$0xff]
    %v923 = vsel %vm132, %v920, 0
    %v926 = vsel %vm132, %v921, 0
    %928 = vmatpush.msra.mxu0 0.0
    %929 = vmatpush.msra.mxu0 0.0
    %930 = vmatpush.msra.mxu0 0.0
    %931 = vmatpush.msra.mxu0 0.0
    %932 = vmatpush.msra.mxu0 0.0
    %933 = vmatpush.msra.mxu0 0.0
    %934 = vmatpush.msra.mxu0 0.0
    %935 = vmatpush.msra.mxu0 0.0
    %936 = vmatpush.msra.mxu0 0.0
    %937 = vmatpush.msra.mxu0 0.0
    %938 = vmatpush.msra.mxu0 0.0
    %939 = vmatpush.msra.mxu0 0.0
    %940 = vmatpush.msra.mxu0 0.0
    %941 = vmatpush.msra.mxu0 0.0
    %942 = vmatpush.msra.mxu0 %v84
    %943 = vmatpush.msra.mxu0 %v80
    %944 = vmatmul.f32.gmra.mxu0 %v923
    %v945 = vpop.f32.mrf.mxu0
    %v946 = vadd.f32 %v124, %v945
    %947 = vmatmul.f32.gmra.mxu0 %v926
    %v948 = vpop.f32.mrf.mxu0
    %v949 = vadd.f32 %v124, %v948
    %950 = vdwg.mxu0
    %951 = vmatpush.msra.mxu0 0.0
    %952 = vmatpush.msra.mxu0 0.0
    %953 = vmatpush.msra.mxu0 0.0
    %954 = vmatpush.msra.mxu0 0.0
    %955 = vmatpush.msra.mxu0 0.0
    %956 = vmatpush.msra.mxu0 0.0
    %957 = vmatpush.msra.mxu0 0.0
    %958 = vmatpush.msra.mxu0 0.0
    %959 = vmatpush.msra.mxu0 0.0
    %960 = vmatpush.msra.mxu0 0.0
    %961 = vmatpush.msra.mxu0 0.0
    %962 = vmatpush.msra.mxu0 0.0
    %963 = vmatpush.msra.mxu0 0.0
    %964 = vmatpush.msra.mxu0 0.0
    %965 = vmatpush.msra.mxu0 %v85
    %966 = vmatpush.msra.mxu0 %v81
    %967 = vmatmul.f32.gmra.mxu0 %v923
    %v968 = vpop.f32.mrf.mxu0
    %v969 = vadd.f32 %v125, %v968
    %970 = vmatmul.f32.gmra.mxu0 %v926
    %v971 = vpop.f32.mrf.mxu0
    %v972 = vadd.f32 %v125, %v971
    %973 = vdwg.mxu0
    %974 = vmatpush.msra.mxu0 0.0
    %975 = vmatpush.msra.mxu0 0.0
    %976 = vmatpush.msra.mxu0 0.0
    %977 = vmatpush.msra.mxu0 0.0
    %978 = vmatpush.msra.mxu0 0.0
    %979 = vmatpush.msra.mxu0 0.0
    %980 = vmatpush.msra.mxu0 0.0
    %981 = vmatpush.msra.mxu0 0.0
    %982 = vmatpush.msra.mxu0 0.0
    %983 = vmatpush.msra.mxu0 0.0
    %984 = vmatpush.msra.mxu0 0.0
    %985 = vmatpush.msra.mxu0 0.0
    %986 = vmatpush.msra.mxu0 0.0
    %987 = vmatpush.msra.mxu0 0.0
    %988 = vmatpush.msra.mxu0 %v86
    %989 = vmatpush.msra.mxu0 %v82
    %990 = vmatmul.f32.gmra.mxu0 %v923
    %v991 = vpop.f32.mrf.mxu0
    %v992 = vadd.f32 %v126, %v991
    %993 = vmatmul.f32.gmra.mxu0 %v926
    %v994 = vpop.f32.mrf.mxu0
    %v995 = vadd.f32 %v126, %v994
    %996 = vdwg.mxu0
    %997 = vmatpush.msra.mxu0 0.0
    %998 = vmatpush.msra.mxu0 0.0
    %999 = vmatpush.msra.mxu0 0.0
    %1000 = vmatpush.msra.mxu0 0.0
    %1001 = vmatpush.msra.mxu0 0.0
    %1002 = vmatpush.msra.mxu0 0.0
    %1003 = vmatpush.msra.mxu0 0.0
    %1004 = vmatpush.msra.mxu0 0.0
    %1005 = vmatpush.msra.mxu0 0.0
    %1006 = vmatpush.msra.mxu0 0.0
    %1007 = vmatpush.msra.mxu0 0.0
    %1008 = vmatpush.msra.mxu0 0.0
    %1009 = vmatpush.msra.mxu0 0.0
    %1010 = vmatpush.msra.mxu0 0.0
    %1011 = vmatpush.msra.mxu0 %v87
    %1012 = vmatpush.msra.mxu0 %v83
    %1013 = vmatmul.f32.gmra.mxu0 %v923
    %v1014 = vpop.f32.mrf.mxu0
    %v1015 = vadd.f32 %v127, %v1014
    %1016 = vmatmul.f32.gmra.mxu0 %v926
    %v1017 = vpop.f32.mrf.mxu0
    %v1018 = vadd.f32 %v127, %v1017
    %1019 = vdwg.mxu0
    %v1022 = vunpack.c.l.b16 %v914
    %v1023 = vunpack.c.l.b16 %v915
    %v1024 = vpack.c.b16 %v1023, %v1022
    %1026 = vmatpush.bf16.msra.mxu0 %v355
    %1027 = vmatpush.bf16.msra.mxu0 %v351
    %1028 = vmatpush.bf16.msra.mxu0 %v347
    %1029 = vmatpush.bf16.msra.mxu0 %v343
    %1030 = vmatpush.bf16.msra.mxu0 %v339
    %1031 = vmatpush.bf16.msra.mxu0 %v335
    %1032 = vmatpush.bf16.msra.mxu0 %v331
    %1033 = vmatpush.bf16.msra.mxu0 %v327
    %1034 = vmatmul.bf16.gmra.mxu0 %v1024
    %v1035 = vpop.f32.mrf.mxu0
    %v1036 = vadd.f32 0.0, %v1035
    %v1037 = vpop.f32.mrf.mxu0
    %v1038 = vadd.f32 0.0, %v1037
    %1039 = vdwg.mxu0
    %1040 = vmatpush.bf16.msra.mxu0 %v356
    %1041 = vmatpush.bf16.msra.mxu0 %v352
    %1042 = vmatpush.bf16.msra.mxu0 %v348
    %1043 = vmatpush.bf16.msra.mxu0 %v344
    %1044 = vmatpush.bf16.msra.mxu0 %v340
    %1045 = vmatpush.bf16.msra.mxu0 %v336
    %1046 = vmatpush.bf16.msra.mxu0 %v332
    %1047 = vmatpush.bf16.msra.mxu0 %v328
    %1048 = vmatmul.bf16.gmra.mxu0 %v1024
    %v1049 = vpop.f32.mrf.mxu0
    %v1050 = vadd.f32 0.0, %v1049
    %v1051 = vpop.f32.mrf.mxu0
    %v1052 = vadd.f32 0.0, %v1051
    %1053 = vdwg.mxu0
    %1054 = vmatpush.bf16.msra.mxu0 %v357
    %1055 = vmatpush.bf16.msra.mxu0 %v353
    %1056 = vmatpush.bf16.msra.mxu0 %v349
    %1057 = vmatpush.bf16.msra.mxu0 %v345
    %1058 = vmatpush.bf16.msra.mxu0 %v341
    %1059 = vmatpush.bf16.msra.mxu0 %v337
    %1060 = vmatpush.bf16.msra.mxu0 %v333
    %1061 = vmatpush.bf16.msra.mxu0 %v329
    %1062 = vmatmul.bf16.gmra.mxu0 %v1024
    %v1063 = vpop.f32.mrf.mxu0
    %v1064 = vadd.f32 0.0, %v1063
    %v1065 = vpop.f32.mrf.mxu0
    %v1066 = vadd.f32 0.0, %v1065
    %1067 = vdwg.mxu0
    %1068 = vmatpush.bf16.msra.mxu0 %v358
    %1069 = vmatpush.bf16.msra.mxu0 %v354
    %1070 = vmatpush.bf16.msra.mxu0 %v350
    %1071 = vmatpush.bf16.msra.mxu0 %v346
    %1072 = vmatpush.bf16.msra.mxu0 %v342
    %1073 = vmatpush.bf16.msra.mxu0 %v338
    %1074 = vmatpush.bf16.msra.mxu0 %v334
    %1075 = vmatpush.bf16.msra.mxu0 %v330
    %1076 = vmatmul.bf16.gmra.mxu0 %v1024
    %v1077 = vpop.f32.mrf.mxu0
    %v1078 = vadd.f32 0.0, %v1077
    %v1079 = vpop.f32.mrf.mxu0
    %v1080 = vadd.f32 0.0, %v1079
    %1081 = vdwg.mxu0
    %v1082 = vadd.f32 %v946, %v1036
    %v1083 = vadd.f32 %v969, %v1050
    %v1084 = vadd.f32 %v992, %v1064
    %v1085 = vadd.f32 %v1015, %v1078
    %v1086 = vadd.f32 %v949, %v1038
    %v1087 = vadd.f32 %v972, %v1052
    %v1088 = vadd.f32 %v995, %v1066
    %v1089 = vadd.f32 %v1018, %v1080
    %v1090 = vmul.f32 %v1082, 0.5
    %v1091 = vmul.f32 %v1086, 0.5
    %v1092 = vtanh.pop %v1090
    %v1093 = vtanh.pop %v1091
    %v1094 = vmul.f32 %v1092, 0.5
    %v1095 = vmul.f32 %v1093, 0.5
    %v1096 = vadd.f32 %v1094, 0.5
    %v1097 = vadd.f32 %v1095, 0.5
    %v1098 = vmul.f32 %v1083, 0.5
    %v1099 = vmul.f32 %v1087, 0.5
    %v1100 = vtanh.pop %v1098
    %v1101 = vtanh.pop %v1099
    %v1102 = vmul.f32 %v1100, 0.5
    %v1103 = vmul.f32 %v1101, 0.5
    %v1104 = vadd.f32 %v1102, 0.5
    %v1105 = vadd.f32 %v1103, 0.5
    %v1106 = vtanh.pop %v1084
    %v1107 = vtanh.pop %v1088
    %v1108 = vmul.f32 %v1085, 0.5
    %v1109 = vmul.f32 %v1089, 0.5
    %v1110 = vtanh.pop %v1108
    %v1111 = vtanh.pop %v1109
    %v1112 = vmul.f32 %v1110, 0.5
    %v1113 = vmul.f32 %v1111, 0.5
    %v1114 = vadd.f32 %v1112, 0.5
    %v1115 = vadd.f32 %v1113, 0.5
    %v1116 = vmul.f32 %v1104, %v908
    %v1117 = vmul.f32 %v1105, %v909
    %v1118 = vmul.f32 %v1096, %v1106
    %v1119 = vmul.f32 %v1097, %v1107
    %v1120 = vadd.f32 %v1116, %v1118
    %v1121 = vadd.f32 %v1117, %v1119
    %v1122 = vtanh.pop %v1120
    %v1123 = vtanh.pop %v1121
    %v1124 = vmul.f32 %v1114, %v1122
    %v1125 = vmul.f32 %v1115, %v1123
    %v1126 = vpack.c.bf16 %v1124, %v1124
    %v1127 = vpack.c.bf16 %v1125, %v1125
    %s1128 = scalar_lea.vmem [#allocation10], 24
    %1129 = vst [vmem:[%s1128] sm:$0xf] %v1126
    %1130 = vst [vmem:[%s1128 + $0x4] sm:$0xf] %v1127
    %s1131 = scalar_lea.vmem [#allocation2], 64
    %v1132 = vld [vmem:[%s1131] sm:$0xff]
    %v1133 = vld [vmem:[%s1131 + $0x8] sm:$0xff]
    %v1135 = vsel %vm132, %v1132, 0
    %v1138 = vsel %vm132, %v1133, 0
    %1140 = vmatpush.msra.mxu0 0.0
    %1141 = vmatpush.msra.mxu0 0.0
    %1142 = vmatpush.msra.mxu0 0.0
    %1143 = vmatpush.msra.mxu0 0.0
    %1144 = vmatpush.msra.mxu0 0.0
    %1145 = vmatpush.msra.mxu0 0.0
    %1146 = vmatpush.msra.mxu0 0.0
    %1147 = vmatpush.msra.mxu0 0.0
    %1148 = vmatpush.msra.mxu0 0.0
    %1149 = vmatpush.msra.mxu0 0.0
    %1150 = vmatpush.msra.mxu0 0.0
    %1151 = vmatpush.msra.mxu0 0.0
    %1152 = vmatpush.msra.mxu0 0.0
    %1153 = vmatpush.msra.mxu0 0.0
    %1154 = vmatpush.msra.mxu0 %v84
    %1155 = vmatpush.msra.mxu0 %v80
    %1156 = vmatmul.f32.gmra.mxu0 %v1135
    %v1157 = vpop.f32.mrf.mxu0
    %v1158 = vadd.f32 %v124, %v1157
    %1159 = vmatmul.f32.gmra.mxu0 %v1138
    %v1160 = vpop.f32.mrf.mxu0
    %v1161 = vadd.f32 %v124, %v1160
    %1162 = vdwg.mxu0
    %1163 = vmatpush.msra.mxu0 0.0
    %1164 = vmatpush.msra.mxu0 0.0
    %1165 = vmatpush.msra.mxu0 0.0
    %1166 = vmatpush.msra.mxu0 0.0
    %1167 = vmatpush.msra.mxu0 0.0
    %1168 = vmatpush.msra.mxu0 0.0
    %1169 = vmatpush.msra.mxu0 0.0
    %1170 = vmatpush.msra.mxu0 0.0
    %1171 = vmatpush.msra.mxu0 0.0
    %1172 = vmatpush.msra.mxu0 0.0
    %1173 = vmatpush.msra.mxu0 0.0
    %1174 = vmatpush.msra.mxu0 0.0
    %1175 = vmatpush.msra.mxu0 0.0
    %1176 = vmatpush.msra.mxu0 0.0
    %1177 = vmatpush.msra.mxu0 %v85
    %1178 = vmatpush.msra.mxu0 %v81
    %1179 = vmatmul.f32.gmra.mxu0 %v1135
    %v1180 = vpop.f32.mrf.mxu0
    %v1181 = vadd.f32 %v125, %v1180
    %1182 = vmatmul.f32.gmra.mxu0 %v1138
    %v1183 = vpop.f32.mrf.mxu0
    %v1184 = vadd.f32 %v125, %v1183
    %1185 = vdwg.mxu0
    %1186 = vmatpush.msra.mxu0 0.0
    %1187 = vmatpush.msra.mxu0 0.0
    %1188 = vmatpush.msra.mxu0 0.0
    %1189 = vmatpush.msra.mxu0 0.0
    %1190 = vmatpush.msra.mxu0 0.0
    %1191 = vmatpush.msra.mxu0 0.0
    %1192 = vmatpush.msra.mxu0 0.0
    %1193 = vmatpush.msra.mxu0 0.0
    %1194 = vmatpush.msra.mxu0 0.0
    %1195 = vmatpush.msra.mxu0 0.0
    %1196 = vmatpush.msra.mxu0 0.0
    %1197 = vmatpush.msra.mxu0 0.0
    %1198 = vmatpush.msra.mxu0 0.0
    %1199 = vmatpush.msra.mxu0 0.0
    %1200 = vmatpush.msra.mxu0 %v86
    %1201 = vmatpush.msra.mxu0 %v82
    %1202 = vmatmul.f32.gmra.mxu0 %v1135
    %v1203 = vpop.f32.mrf.mxu0
    %v1204 = vadd.f32 %v126, %v1203
    %1205 = vmatmul.f32.gmra.mxu0 %v1138
    %v1206 = vpop.f32.mrf.mxu0
    %v1207 = vadd.f32 %v126, %v1206
    %1208 = vdwg.mxu0
    %1209 = vmatpush.msra.mxu0 0.0
    %1210 = vmatpush.msra.mxu0 0.0
    %1211 = vmatpush.msra.mxu0 0.0
    %1212 = vmatpush.msra.mxu0 0.0
    %1213 = vmatpush.msra.mxu0 0.0
    %1214 = vmatpush.msra.mxu0 0.0
    %1215 = vmatpush.msra.mxu0 0.0
    %1216 = vmatpush.msra.mxu0 0.0
    %1217 = vmatpush.msra.mxu0 0.0
    %1218 = vmatpush.msra.mxu0 0.0
    %1219 = vmatpush.msra.mxu0 0.0
    %1220 = vmatpush.msra.mxu0 0.0
    %1221 = vmatpush.msra.mxu0 0.0
    %1222 = vmatpush.msra.mxu0 0.0
    %1223 = vmatpush.msra.mxu0 %v87
    %1224 = vmatpush.msra.mxu0 %v83
    %1225 = vmatmul.f32.gmra.mxu0 %v1135
    %v1226 = vpop.f32.mrf.mxu0
    %v1227 = vadd.f32 %v127, %v1226
    %1228 = vmatmul.f32.gmra.mxu0 %v1138
    %v1229 = vpop.f32.mrf.mxu0
    %v1230 = vadd.f32 %v127, %v1229
    %1231 = vdwg.mxu0
    %v1234 = vunpack.c.l.b16 %v1126
    %v1235 = vunpack.c.l.b16 %v1127
    %v1236 = vpack.c.b16 %v1235, %v1234
    %1238 = vmatpush.bf16.msra.mxu0 %v355
    %1239 = vmatpush.bf16.msra.mxu0 %v351
    %1240 = vmatpush.bf16.msra.mxu0 %v347
    %1241 = vmatpush.bf16.msra.mxu0 %v343
    %1242 = vmatpush.bf16.msra.mxu0 %v339
    %1243 = vmatpush.bf16.msra.mxu0 %v335
    %1244 = vmatpush.bf16.msra.mxu0 %v331
    %1245 = vmatpush.bf16.msra.mxu0 %v327
    %1246 = vmatmul.bf16.gmra.mxu0 %v1236
    %v1247 = vpop.f32.mrf.mxu0
    %v1248 = vadd.f32 0.0, %v1247
    %v1249 = vpop.f32.mrf.mxu0
    %v1250 = vadd.f32 0.0, %v1249
    %1251 = vdwg.mxu0
    %1252 = vmatpush.bf16.msra.mxu0 %v356
    %1253 = vmatpush.bf16.msra.mxu0 %v352
    %1254 = vmatpush.bf16.msra.mxu0 %v348
    %1255 = vmatpush.bf16.msra.mxu0 %v344
    %1256 = vmatpush.bf16.msra.mxu0 %v340
    %1257 = vmatpush.bf16.msra.mxu0 %v336
    %1258 = vmatpush.bf16.msra.mxu0 %v332
    %1259 = vmatpush.bf16.msra.mxu0 %v328
    %1260 = vmatmul.bf16.gmra.mxu0 %v1236
    %v1261 = vpop.f32.mrf.mxu0
    %v1262 = vadd.f32 0.0, %v1261
    %v1263 = vpop.f32.mrf.mxu0
    %v1264 = vadd.f32 0.0, %v1263
    %1265 = vdwg.mxu0
    %1266 = vmatpush.bf16.msra.mxu0 %v357
    %1267 = vmatpush.bf16.msra.mxu0 %v353
    %1268 = vmatpush.bf16.msra.mxu0 %v349
    %1269 = vmatpush.bf16.msra.mxu0 %v345
    %1270 = vmatpush.bf16.msra.mxu0 %v341
    %1271 = vmatpush.bf16.msra.mxu0 %v337
    %1272 = vmatpush.bf16.msra.mxu0 %v333
    %1273 = vmatpush.bf16.msra.mxu0 %v329
    %1274 = vmatmul.bf16.gmra.mxu0 %v1236
    %v1275 = vpop.f32.mrf.mxu0
    %v1276 = vadd.f32 0.0, %v1275
    %v1277 = vpop.f32.mrf.mxu0
    %v1278 = vadd.f32 0.0, %v1277
    %1279 = vdwg.mxu0
    %1280 = vmatpush.bf16.msra.mxu0 %v358
    %1281 = vmatpush.bf16.msra.mxu0 %v354
    %1282 = vmatpush.bf16.msra.mxu0 %v350
    %1283 = vmatpush.bf16.msra.mxu0 %v346
    %1284 = vmatpush.bf16.msra.mxu0 %v342
    %1285 = vmatpush.bf16.msra.mxu0 %v338
    %1286 = vmatpush.bf16.msra.mxu0 %v334
    %1287 = vmatpush.bf16.msra.mxu0 %v330
    %1288 = vmatmul.bf16.gmra.mxu0 %v1236
    %v1289 = vpop.f32.mrf.mxu0
    %v1290 = vadd.f32 0.0, %v1289
    %v1291 = vpop.f32.mrf.mxu0
    %v1292 = vadd.f32 0.0, %v1291
    %1293 = vdwg.mxu0
    %v1294 = vadd.f32 %v1158, %v1248
    %v1295 = vadd.f32 %v1181, %v1262
    %v1296 = vadd.f32 %v1204, %v1276
    %v1297 = vadd.f32 %v1227, %v1290
    %v1298 = vadd.f32 %v1161, %v1250
    %v1299 = vadd.f32 %v1184, %v1264
    %v1300 = vadd.f32 %v1207, %v1278
    %v1301 = vadd.f32 %v1230, %v1292
    %v1302 = vmul.f32 %v1294, 0.5
    %v1303 = vmul.f32 %v1298, 0.5
    %v1304 = vtanh.pop %v1302
    %v1305 = vtanh.pop %v1303
    %v1306 = vmul.f32 %v1304, 0.5
    %v1307 = vmul.f32 %v1305, 0.5
    %v1308 = vadd.f32 %v1306, 0.5
    %v1309 = vadd.f32 %v1307, 0.5
    %v1310 = vmul.f32 %v1295, 0.5
    %v1311 = vmul.f32 %v1299, 0.5
    %v1312 = vtanh.pop %v1310
    %v1313 = vtanh.pop %v1311
    %v1314 = vmul.f32 %v1312, 0.5
    %v1315 = vmul.f32 %v1313, 0.5
    %v1316 = vadd.f32 %v1314, 0.5
    %v1317 = vadd.f32 %v1315, 0.5
    %v1318 = vtanh.pop %v1296
    %v1319 = vtanh.pop %v1300
    %v1320 = vmul.f32 %v1297, 0.5
    %v1321 = vmul.f32 %v1301, 0.5
    %v1322 = vtanh.pop %v1320
    %v1323 = vtanh.pop %v1321
    %v1324 = vmul.f32 %v1322, 0.5
    %v1325 = vmul.f32 %v1323, 0.5
    %v1326 = vadd.f32 %v1324, 0.5
    %v1327 = vadd.f32 %v1325, 0.5
    %v1328 = vmul.f32 %v1316, %v1120
    %v1329 = vmul.f32 %v1317, %v1121
    %v1330 = vmul.f32 %v1308, %v1318
    %v1331 = vmul.f32 %v1309, %v1319
    %v1332 = vadd.f32 %v1328, %v1330
    %v1333 = vadd.f32 %v1329, %v1331
    %v1334 = vtanh.pop %v1332
    %v1335 = vtanh.pop %v1333
    %v1336 = vmul.f32 %v1326, %v1334
    %v1337 = vmul.f32 %v1327, %v1335
    %v1338 = vpack.c.bf16 %v1336, %v1336
    %v1339 = vpack.c.bf16 %v1337, %v1337
    %s1340 = scalar_lea.vmem [#allocation10], 32
    %1341 = vst [vmem:[%s1340] sm:$0xf] %v1338
    %1342 = vst [vmem:[%s1340 + $0x4] sm:$0xf] %v1339
    %s1343 = scalar_lea.vmem [#allocation2], 80
    %v1344 = vld [vmem:[%s1343] sm:$0xff]
    %v1345 = vld [vmem:[%s1343 + $0x8] sm:$0xff]
    %v1347 = vsel %vm132, %v1344, 0
    %v1350 = vsel %vm132, %v1345, 0
    %1352 = vmatpush.msra.mxu0 0.0
    %1353 = vmatpush.msra.mxu0 0.0
    %1354 = vmatpush.msra.mxu0 0.0
    %1355 = vmatpush.msra.mxu0 0.0
    %1356 = vmatpush.msra.mxu0 0.0
    %1357 = vmatpush.msra.mxu0 0.0
    %1358 = vmatpush.msra.mxu0 0.0
    %1359 = vmatpush.msra.mxu0 0.0
    %1360 = vmatpush.msra.mxu0 0.0
    %1361 = vmatpush.msra.mxu0 0.0
    %1362 = vmatpush.msra.mxu0 0.0
    %1363 = vmatpush.msra.mxu0 0.0
    %1364 = vmatpush.msra.mxu0 0.0
    %1365 = vmatpush.msra.mxu0 0.0
    %1366 = vmatpush.msra.mxu0 %v84
    %1367 = vmatpush.msra.mxu0 %v80
    %1368 = vmatmul.f32.gmra.mxu0 %v1347
    %v1369 = vpop.f32.mrf.mxu0
    %v1370 = vadd.f32 %v124, %v1369
    %1371 = vmatmul.f32.gmra.mxu0 %v1350
    %v1372 = vpop.f32.mrf.mxu0
    %v1373 = vadd.f32 %v124, %v1372
    %1374 = vdwg.mxu0
    %1375 = vmatpush.msra.mxu0 0.0
    %1376 = vmatpush.msra.mxu0 0.0
    %1377 = vmatpush.msra.mxu0 0.0
    %1378 = vmatpush.msra.mxu0 0.0
    %1379 = vmatpush.msra.mxu0 0.0
    %1380 = vmatpush.msra.mxu0 0.0
    %1381 = vmatpush.msra.mxu0 0.0
    %1382 = vmatpush.msra.mxu0 0.0
    %1383 = vmatpush.msra.mxu0 0.0
    %1384 = vmatpush.msra.mxu0 0.0
    %1385 = vmatpush.msra.mxu0 0.0
    %1386 = vmatpush.msra.mxu0 0.0
    %1387 = vmatpush.msra.mxu0 0.0
    %1388 = vmatpush.msra.mxu0 0.0
    %1389 = vmatpush.msra.mxu0 %v85
    %1390 = vmatpush.msra.mxu0 %v81
    %1391 = vmatmul.f32.gmra.mxu0 %v1347
    %v1392 = vpop.f32.mrf.mxu0
    %v1393 = vadd.f32 %v125, %v1392
    %1394 = vmatmul.f32.gmra.mxu0 %v1350
    %v1395 = vpop.f32.mrf.mxu0
    %v1396 = vadd.f32 %v125, %v1395
    %1397 = vdwg.mxu0
    %1398 = vmatpush.msra.mxu0 0.0
    %1399 = vmatpush.msra.mxu0 0.0
    %1400 = vmatpush.msra.mxu0 0.0
    %1401 = vmatpush.msra.mxu0 0.0
    %1402 = vmatpush.msra.mxu0 0.0
    %1403 = vmatpush.msra.mxu0 0.0
    %1404 = vmatpush.msra.mxu0 0.0
    %1405 = vmatpush.msra.mxu0 0.0
    %1406 = vmatpush.msra.mxu0 0.0
    %1407 = vmatpush.msra.mxu0 0.0
    %1408 = vmatpush.msra.mxu0 0.0
    %1409 = vmatpush.msra.mxu0 0.0
    %1410 = vmatpush.msra.mxu0 0.0
    %1411 = vmatpush.msra.mxu0 0.0
    %1412 = vmatpush.msra.mxu0 %v86
    %1413 = vmatpush.msra.mxu0 %v82
    %1414 = vmatmul.f32.gmra.mxu0 %v1347
    %v1415 = vpop.f32.mrf.mxu0
    %v1416 = vadd.f32 %v126, %v1415
    %1417 = vmatmul.f32.gmra.mxu0 %v1350
    %v1418 = vpop.f32.mrf.mxu0
    %v1419 = vadd.f32 %v126, %v1418
    %1420 = vdwg.mxu0
    %1421 = vmatpush.msra.mxu0 0.0
    %1422 = vmatpush.msra.mxu0 0.0
    %1423 = vmatpush.msra.mxu0 0.0
    %1424 = vmatpush.msra.mxu0 0.0
    %1425 = vmatpush.msra.mxu0 0.0
    %1426 = vmatpush.msra.mxu0 0.0
    %1427 = vmatpush.msra.mxu0 0.0
    %1428 = vmatpush.msra.mxu0 0.0
    %1429 = vmatpush.msra.mxu0 0.0
    %1430 = vmatpush.msra.mxu0 0.0
    %1431 = vmatpush.msra.mxu0 0.0
    %1432 = vmatpush.msra.mxu0 0.0
    %1433 = vmatpush.msra.mxu0 0.0
    %1434 = vmatpush.msra.mxu0 0.0
    %1435 = vmatpush.msra.mxu0 %v87
    %1436 = vmatpush.msra.mxu0 %v83
    %1437 = vmatmul.f32.gmra.mxu0 %v1347
    %v1438 = vpop.f32.mrf.mxu0
    %v1439 = vadd.f32 %v127, %v1438
    %1440 = vmatmul.f32.gmra.mxu0 %v1350
    %v1441 = vpop.f32.mrf.mxu0
    %v1442 = vadd.f32 %v127, %v1441
    %1443 = vdwg.mxu0
    %v1446 = vunpack.c.l.b16 %v1338
    %v1447 = vunpack.c.l.b16 %v1339
    %v1448 = vpack.c.b16 %v1447, %v1446
    %1450 = vmatpush.bf16.msra.mxu0 %v355
    %1451 = vmatpush.bf16.msra.mxu0 %v351
    %1452 = vmatpush.bf16.msra.mxu0 %v347
    %1453 = vmatpush.bf16.msra.mxu0 %v343
    %1454 = vmatpush.bf16.msra.mxu0 %v339
    %1455 = vmatpush.bf16.msra.mxu0 %v335
    %1456 = vmatpush.bf16.msra.mxu0 %v331
    %1457 = vmatpush.bf16.msra.mxu0 %v327
    %1458 = vmatmul.bf16.gmra.mxu0 %v1448
    %v1459 = vpop.f32.mrf.mxu0
    %v1460 = vadd.f32 0.0, %v1459
    %v1461 = vpop.f32.mrf.mxu0
    %v1462 = vadd.f32 0.0, %v1461
    %1463 = vdwg.mxu0
    %1464 = vmatpush.bf16.msra.mxu0 %v356
    %1465 = vmatpush.bf16.msra.mxu0 %v352
    %1466 = vmatpush.bf16.msra.mxu0 %v348
    %1467 = vmatpush.bf16.msra.mxu0 %v344
    %1468 = vmatpush.bf16.msra.mxu0 %v340
    %1469 = vmatpush.bf16.msra.mxu0 %v336
    %1470 = vmatpush.bf16.msra.mxu0 %v332
    %1471 = vmatpush.bf16.msra.mxu0 %v328
    %1472 = vmatmul.bf16.gmra.mxu0 %v1448
    %v1473 = vpop.f32.mrf.mxu0
    %v1474 = vadd.f32 0.0, %v1473
    %v1475 = vpop.f32.mrf.mxu0
    %v1476 = vadd.f32 0.0, %v1475
    %1477 = vdwg.mxu0
    %1478 = vmatpush.bf16.msra.mxu0 %v357
    %1479 = vmatpush.bf16.msra.mxu0 %v353
    %1480 = vmatpush.bf16.msra.mxu0 %v349
    %1481 = vmatpush.bf16.msra.mxu0 %v345
    %1482 = vmatpush.bf16.msra.mxu0 %v341
    %1483 = vmatpush.bf16.msra.mxu0 %v337
    %1484 = vmatpush.bf16.msra.mxu0 %v333
    %1485 = vmatpush.bf16.msra.mxu0 %v329
    %1486 = vmatmul.bf16.gmra.mxu0 %v1448
    %v1487 = vpop.f32.mrf.mxu0
    %v1488 = vadd.f32 0.0, %v1487
    %v1489 = vpop.f32.mrf.mxu0
    %v1490 = vadd.f32 0.0, %v1489
    %1491 = vdwg.mxu0
    %1492 = vmatpush.bf16.msra.mxu0 %v358
    %1493 = vmatpush.bf16.msra.mxu0 %v354
    %1494 = vmatpush.bf16.msra.mxu0 %v350
    %1495 = vmatpush.bf16.msra.mxu0 %v346
    %1496 = vmatpush.bf16.msra.mxu0 %v342
    %1497 = vmatpush.bf16.msra.mxu0 %v338
    %1498 = vmatpush.bf16.msra.mxu0 %v334
    %1499 = vmatpush.bf16.msra.mxu0 %v330
    %1500 = vmatmul.bf16.gmra.mxu0 %v1448
    %v1501 = vpop.f32.mrf.mxu0
    %v1502 = vadd.f32 0.0, %v1501
    %v1503 = vpop.f32.mrf.mxu0
    %v1504 = vadd.f32 0.0, %v1503
    %1505 = vdwg.mxu0
    %v1506 = vadd.f32 %v1370, %v1460
    %v1507 = vadd.f32 %v1393, %v1474
    %v1508 = vadd.f32 %v1416, %v1488
    %v1509 = vadd.f32 %v1439, %v1502
    %v1510 = vadd.f32 %v1373, %v1462
    %v1511 = vadd.f32 %v1396, %v1476
    %v1512 = vadd.f32 %v1419, %v1490
    %v1513 = vadd.f32 %v1442, %v1504
    %v1514 = vmul.f32 %v1506, 0.5
    %v1515 = vmul.f32 %v1510, 0.5
    %v1516 = vtanh.pop %v1514
    %v1517 = vtanh.pop %v1515
    %v1518 = vmul.f32 %v1516, 0.5
    %v1519 = vmul.f32 %v1517, 0.5
    %v1520 = vadd.f32 %v1518, 0.5
    %v1521 = vadd.f32 %v1519, 0.5
    %v1522 = vmul.f32 %v1507, 0.5
    %v1523 = vmul.f32 %v1511, 0.5
    %v1524 = vtanh.pop %v1522
    %v1525 = vtanh.pop %v1523
    %v1526 = vmul.f32 %v1524, 0.5
    %v1527 = vmul.f32 %v1525, 0.5
    %v1528 = vadd.f32 %v1526, 0.5
    %v1529 = vadd.f32 %v1527, 0.5
    %v1530 = vtanh.pop %v1508
    %v1531 = vtanh.pop %v1512
    %v1532 = vmul.f32 %v1509, 0.5
    %v1533 = vmul.f32 %v1513, 0.5
    %v1534 = vtanh.pop %v1532
    %v1535 = vtanh.pop %v1533
    %v1536 = vmul.f32 %v1534, 0.5
    %v1537 = vmul.f32 %v1535, 0.5
    %v1538 = vadd.f32 %v1536, 0.5
    %v1539 = vadd.f32 %v1537, 0.5
    %v1540 = vmul.f32 %v1528, %v1332
    %v1541 = vmul.f32 %v1529, %v1333
    %v1542 = vmul.f32 %v1520, %v1530
    %v1543 = vmul.f32 %v1521, %v1531
    %v1544 = vadd.f32 %v1540, %v1542
    %v1545 = vadd.f32 %v1541, %v1543
    %v1546 = vtanh.pop %v1544
    %v1547 = vtanh.pop %v1545
    %v1548 = vmul.f32 %v1538, %v1546
    %v1549 = vmul.f32 %v1539, %v1547
    %v1550 = vpack.c.bf16 %v1548, %v1548
    %v1551 = vpack.c.bf16 %v1549, %v1549
    %s1552 = scalar_lea.vmem [#allocation10], 40
    %1553 = vst [vmem:[%s1552] sm:$0xf] %v1550
    %1554 = vst [vmem:[%s1552 + $0x4] sm:$0xf] %v1551
    %s1555 = scalar_lea.vmem [#allocation2], 96
    %v1556 = vld [vmem:[%s1555] sm:$0xff]
    %v1557 = vld [vmem:[%s1555 + $0x8] sm:$0xff]
    %v1559 = vsel %vm132, %v1556, 0
    %v1562 = vsel %vm132, %v1557, 0
    %1564 = vmatpush.msra.mxu0 0.0
    %1565 = vmatpush.msra.mxu0 0.0
    %1566 = vmatpush.msra.mxu0 0.0
    %1567 = vmatpush.msra.mxu0 0.0
    %1568 = vmatpush.msra.mxu0 0.0
    %1569 = vmatpush.msra.mxu0 0.0
    %1570 = vmatpush.msra.mxu0 0.0
    %1571 = vmatpush.msra.mxu0 0.0
    %1572 = vmatpush.msra.mxu0 0.0
    %1573 = vmatpush.msra.mxu0 0.0
    %1574 = vmatpush.msra.mxu0 0.0
    %1575 = vmatpush.msra.mxu0 0.0
    %1576 = vmatpush.msra.mxu0 0.0
    %1577 = vmatpush.msra.mxu0 0.0
    %1578 = vmatpush.msra.mxu0 %v84
    %1579 = vmatpush.msra.mxu0 %v80
    %1580 = vmatmul.f32.gmra.mxu0 %v1559
    %v1581 = vpop.f32.mrf.mxu0
    %v1582 = vadd.f32 %v124, %v1581
    %1583 = vmatmul.f32.gmra.mxu0 %v1562
    %v1584 = vpop.f32.mrf.mxu0
    %v1585 = vadd.f32 %v124, %v1584
    %1586 = vdwg.mxu0
    %1587 = vmatpush.msra.mxu0 0.0
    %1588 = vmatpush.msra.mxu0 0.0
    %1589 = vmatpush.msra.mxu0 0.0
    %1590 = vmatpush.msra.mxu0 0.0
    %1591 = vmatpush.msra.mxu0 0.0
    %1592 = vmatpush.msra.mxu0 0.0
    %1593 = vmatpush.msra.mxu0 0.0
    %1594 = vmatpush.msra.mxu0 0.0
    %1595 = vmatpush.msra.mxu0 0.0
    %1596 = vmatpush.msra.mxu0 0.0
    %1597 = vmatpush.msra.mxu0 0.0
    %1598 = vmatpush.msra.mxu0 0.0
    %1599 = vmatpush.msra.mxu0 0.0
    %1600 = vmatpush.msra.mxu0 0.0
    %1601 = vmatpush.msra.mxu0 %v85
    %1602 = vmatpush.msra.mxu0 %v81
    %1603 = vmatmul.f32.gmra.mxu0 %v1559
    %v1604 = vpop.f32.mrf.mxu0
    %v1605 = vadd.f32 %v125, %v1604
    %1606 = vmatmul.f32.gmra.mxu0 %v1562
    %v1607 = vpop.f32.mrf.mxu0
    %v1608 = vadd.f32 %v125, %v1607
    %1609 = vdwg.mxu0
    %1610 = vmatpush.msra.mxu0 0.0
    %1611 = vmatpush.msra.mxu0 0.0
    %1612 = vmatpush.msra.mxu0 0.0
    %1613 = vmatpush.msra.mxu0 0.0
    %1614 = vmatpush.msra.mxu0 0.0
    %1615 = vmatpush.msra.mxu0 0.0
    %1616 = vmatpush.msra.mxu0 0.0
    %1617 = vmatpush.msra.mxu0 0.0
    %1618 = vmatpush.msra.mxu0 0.0
    %1619 = vmatpush.msra.mxu0 0.0
    %1620 = vmatpush.msra.mxu0 0.0
    %1621 = vmatpush.msra.mxu0 0.0
    %1622 = vmatpush.msra.mxu0 0.0
    %1623 = vmatpush.msra.mxu0 0.0
    %1624 = vmatpush.msra.mxu0 %v86
    %1625 = vmatpush.msra.mxu0 %v82
    %1626 = vmatmul.f32.gmra.mxu0 %v1559
    %v1627 = vpop.f32.mrf.mxu0
    %v1628 = vadd.f32 %v126, %v1627
    %1629 = vmatmul.f32.gmra.mxu0 %v1562
    %v1630 = vpop.f32.mrf.mxu0
    %v1631 = vadd.f32 %v126, %v1630
    %1632 = vdwg.mxu0
    %1633 = vmatpush.msra.mxu0 0.0
    %1634 = vmatpush.msra.mxu0 0.0
    %1635 = vmatpush.msra.mxu0 0.0
    %1636 = vmatpush.msra.mxu0 0.0
    %1637 = vmatpush.msra.mxu0 0.0
    %1638 = vmatpush.msra.mxu0 0.0
    %1639 = vmatpush.msra.mxu0 0.0
    %1640 = vmatpush.msra.mxu0 0.0
    %1641 = vmatpush.msra.mxu0 0.0
    %1642 = vmatpush.msra.mxu0 0.0
    %1643 = vmatpush.msra.mxu0 0.0
    %1644 = vmatpush.msra.mxu0 0.0
    %1645 = vmatpush.msra.mxu0 0.0
    %1646 = vmatpush.msra.mxu0 0.0
    %1647 = vmatpush.msra.mxu0 %v87
    %1648 = vmatpush.msra.mxu0 %v83
    %1649 = vmatmul.f32.gmra.mxu0 %v1559
    %v1650 = vpop.f32.mrf.mxu0
    %v1651 = vadd.f32 %v127, %v1650
    %1652 = vmatmul.f32.gmra.mxu0 %v1562
    %v1653 = vpop.f32.mrf.mxu0
    %v1654 = vadd.f32 %v127, %v1653
    %1655 = vdwg.mxu0
    %v1658 = vunpack.c.l.b16 %v1550
    %v1659 = vunpack.c.l.b16 %v1551
    %v1660 = vpack.c.b16 %v1659, %v1658
    %1662 = vmatpush.bf16.msra.mxu0 %v355
    %1663 = vmatpush.bf16.msra.mxu0 %v351
    %1664 = vmatpush.bf16.msra.mxu0 %v347
    %1665 = vmatpush.bf16.msra.mxu0 %v343
    %1666 = vmatpush.bf16.msra.mxu0 %v339
    %1667 = vmatpush.bf16.msra.mxu0 %v335
    %1668 = vmatpush.bf16.msra.mxu0 %v331
    %1669 = vmatpush.bf16.msra.mxu0 %v327
    %1670 = vmatmul.bf16.gmra.mxu0 %v1660
    %v1671 = vpop.f32.mrf.mxu0
    %v1672 = vadd.f32 0.0, %v1671
    %v1673 = vpop.f32.mrf.mxu0
    %v1674 = vadd.f32 0.0, %v1673
    %1675 = vdwg.mxu0
    %1676 = vmatpush.bf16.msra.mxu0 %v356
    %1677 = vmatpush.bf16.msra.mxu0 %v352
    %1678 = vmatpush.bf16.msra.mxu0 %v348
    %1679 = vmatpush.bf16.msra.mxu0 %v344
    %1680 = vmatpush.bf16.msra.mxu0 %v340
    %1681 = vmatpush.bf16.msra.mxu0 %v336
    %1682 = vmatpush.bf16.msra.mxu0 %v332
    %1683 = vmatpush.bf16.msra.mxu0 %v328
    %1684 = vmatmul.bf16.gmra.mxu0 %v1660
    %v1685 = vpop.f32.mrf.mxu0
    %v1686 = vadd.f32 0.0, %v1685
    %v1687 = vpop.f32.mrf.mxu0
    %v1688 = vadd.f32 0.0, %v1687
    %1689 = vdwg.mxu0
    %1690 = vmatpush.bf16.msra.mxu0 %v357
    %1691 = vmatpush.bf16.msra.mxu0 %v353
    %1692 = vmatpush.bf16.msra.mxu0 %v349
    %1693 = vmatpush.bf16.msra.mxu0 %v345
    %1694 = vmatpush.bf16.msra.mxu0 %v341
    %1695 = vmatpush.bf16.msra.mxu0 %v337
    %1696 = vmatpush.bf16.msra.mxu0 %v333
    %1697 = vmatpush.bf16.msra.mxu0 %v329
    %1698 = vmatmul.bf16.gmra.mxu0 %v1660
    %v1699 = vpop.f32.mrf.mxu0
    %v1700 = vadd.f32 0.0, %v1699
    %v1701 = vpop.f32.mrf.mxu0
    %v1702 = vadd.f32 0.0, %v1701
    %1703 = vdwg.mxu0
    %1704 = vmatpush.bf16.msra.mxu0 %v358
    %1705 = vmatpush.bf16.msra.mxu0 %v354
    %1706 = vmatpush.bf16.msra.mxu0 %v350
    %1707 = vmatpush.bf16.msra.mxu0 %v346
    %1708 = vmatpush.bf16.msra.mxu0 %v342
    %1709 = vmatpush.bf16.msra.mxu0 %v338
    %1710 = vmatpush.bf16.msra.mxu0 %v334
    %1711 = vmatpush.bf16.msra.mxu0 %v330
    %1712 = vmatmul.bf16.gmra.mxu0 %v1660
    %v1713 = vpop.f32.mrf.mxu0
    %v1714 = vadd.f32 0.0, %v1713
    %v1715 = vpop.f32.mrf.mxu0
    %v1716 = vadd.f32 0.0, %v1715
    %1717 = vdwg.mxu0
    %v1718 = vadd.f32 %v1582, %v1672
    %v1719 = vadd.f32 %v1605, %v1686
    %v1720 = vadd.f32 %v1628, %v1700
    %v1721 = vadd.f32 %v1651, %v1714
    %v1722 = vadd.f32 %v1585, %v1674
    %v1723 = vadd.f32 %v1608, %v1688
    %v1724 = vadd.f32 %v1631, %v1702
    %v1725 = vadd.f32 %v1654, %v1716
    %v1726 = vmul.f32 %v1718, 0.5
    %v1727 = vmul.f32 %v1722, 0.5
    %v1728 = vtanh.pop %v1726
    %v1729 = vtanh.pop %v1727
    %v1730 = vmul.f32 %v1728, 0.5
    %v1731 = vmul.f32 %v1729, 0.5
    %v1732 = vadd.f32 %v1730, 0.5
    %v1733 = vadd.f32 %v1731, 0.5
    %v1734 = vmul.f32 %v1719, 0.5
    %v1735 = vmul.f32 %v1723, 0.5
    %v1736 = vtanh.pop %v1734
    %v1737 = vtanh.pop %v1735
    %v1738 = vmul.f32 %v1736, 0.5
    %v1739 = vmul.f32 %v1737, 0.5
    %v1740 = vadd.f32 %v1738, 0.5
    %v1741 = vadd.f32 %v1739, 0.5
    %v1742 = vtanh.pop %v1720
    %v1743 = vtanh.pop %v1724
    %v1744 = vmul.f32 %v1721, 0.5
    %v1745 = vmul.f32 %v1725, 0.5
    %v1746 = vtanh.pop %v1744
    %v1747 = vtanh.pop %v1745
    %v1748 = vmul.f32 %v1746, 0.5
    %v1749 = vmul.f32 %v1747, 0.5
    %v1750 = vadd.f32 %v1748, 0.5
    %v1751 = vadd.f32 %v1749, 0.5
    %v1752 = vmul.f32 %v1740, %v1544
    %v1753 = vmul.f32 %v1741, %v1545
    %v1754 = vmul.f32 %v1732, %v1742
    %v1755 = vmul.f32 %v1733, %v1743
    %v1756 = vadd.f32 %v1752, %v1754
    %v1757 = vadd.f32 %v1753, %v1755
    %v1758 = vtanh.pop %v1756
    %v1759 = vtanh.pop %v1757
    %v1760 = vmul.f32 %v1750, %v1758
    %v1761 = vmul.f32 %v1751, %v1759
    %v1762 = vpack.c.bf16 %v1760, %v1760
    %v1763 = vpack.c.bf16 %v1761, %v1761
    %s1764 = scalar_lea.vmem [#allocation10], 48
    %1765 = vst [vmem:[%s1764] sm:$0xf] %v1762
    %1766 = vst [vmem:[%s1764 + $0x4] sm:$0xf] %v1763
    %s1767 = scalar_lea.vmem [#allocation2], 112
    %v1768 = vld [vmem:[%s1767] sm:$0xff]
    %v1769 = vld [vmem:[%s1767 + $0x8] sm:$0xff]
    %v1771 = vsel %vm132, %v1768, 0
    %v1774 = vsel %vm132, %v1769, 0
    %1776 = vmatpush.msra.mxu0 0.0
    %1777 = vmatpush.msra.mxu0 0.0
    %1778 = vmatpush.msra.mxu0 0.0
    %1779 = vmatpush.msra.mxu0 0.0
    %1780 = vmatpush.msra.mxu0 0.0
    %1781 = vmatpush.msra.mxu0 0.0
    %1782 = vmatpush.msra.mxu0 0.0
    %1783 = vmatpush.msra.mxu0 0.0
    %1784 = vmatpush.msra.mxu0 0.0
    %1785 = vmatpush.msra.mxu0 0.0
    %1786 = vmatpush.msra.mxu0 0.0
    %1787 = vmatpush.msra.mxu0 0.0
    %1788 = vmatpush.msra.mxu0 0.0
    %1789 = vmatpush.msra.mxu0 0.0
    %1790 = vmatpush.msra.mxu0 %v84
    %1791 = vmatpush.msra.mxu0 %v80
    %1792 = vmatmul.f32.gmra.mxu0 %v1771
    %v1793 = vpop.f32.mrf.mxu0
    %v1794 = vadd.f32 %v124, %v1793
    %1795 = vmatmul.f32.gmra.mxu0 %v1774
    %v1796 = vpop.f32.mrf.mxu0
    %v1797 = vadd.f32 %v124, %v1796
    %1798 = vdwg.mxu0
    %1799 = vmatpush.msra.mxu0 0.0
    %1800 = vmatpush.msra.mxu0 0.0
    %1801 = vmatpush.msra.mxu0 0.0
    %1802 = vmatpush.msra.mxu0 0.0
    %1803 = vmatpush.msra.mxu0 0.0
    %1804 = vmatpush.msra.mxu0 0.0
    %1805 = vmatpush.msra.mxu0 0.0
    %1806 = vmatpush.msra.mxu0 0.0
    %1807 = vmatpush.msra.mxu0 0.0
    %1808 = vmatpush.msra.mxu0 0.0
    %1809 = vmatpush.msra.mxu0 0.0
    %1810 = vmatpush.msra.mxu0 0.0
    %1811 = vmatpush.msra.mxu0 0.0
    %1812 = vmatpush.msra.mxu0 0.0
    %1813 = vmatpush.msra.mxu0 %v85
    %1814 = vmatpush.msra.mxu0 %v81
    %1815 = vmatmul.f32.gmra.mxu0 %v1771
    %v1816 = vpop.f32.mrf.mxu0
    %v1817 = vadd.f32 %v125, %v1816
    %1818 = vmatmul.f32.gmra.mxu0 %v1774
    %v1819 = vpop.f32.mrf.mxu0
    %v1820 = vadd.f32 %v125, %v1819
    %1821 = vdwg.mxu0
    %1822 = vmatpush.msra.mxu0 0.0
    %1823 = vmatpush.msra.mxu0 0.0
    %1824 = vmatpush.msra.mxu0 0.0
    %1825 = vmatpush.msra.mxu0 0.0
    %1826 = vmatpush.msra.mxu0 0.0
    %1827 = vmatpush.msra.mxu0 0.0
    %1828 = vmatpush.msra.mxu0 0.0
    %1829 = vmatpush.msra.mxu0 0.0
    %1830 = vmatpush.msra.mxu0 0.0
    %1831 = vmatpush.msra.mxu0 0.0
    %1832 = vmatpush.msra.mxu0 0.0
    %1833 = vmatpush.msra.mxu0 0.0
    %1834 = vmatpush.msra.mxu0 0.0
    %1835 = vmatpush.msra.mxu0 0.0
    %1836 = vmatpush.msra.mxu0 %v86
    %1837 = vmatpush.msra.mxu0 %v82
    %1838 = vmatmul.f32.gmra.mxu0 %v1771
    %v1839 = vpop.f32.mrf.mxu0
    %v1840 = vadd.f32 %v126, %v1839
    %1841 = vmatmul.f32.gmra.mxu0 %v1774
    %v1842 = vpop.f32.mrf.mxu0
    %v1843 = vadd.f32 %v126, %v1842
    %1844 = vdwg.mxu0
    %1845 = vmatpush.msra.mxu0 0.0
    %1846 = vmatpush.msra.mxu0 0.0
    %1847 = vmatpush.msra.mxu0 0.0
    %1848 = vmatpush.msra.mxu0 0.0
    %1849 = vmatpush.msra.mxu0 0.0
    %1850 = vmatpush.msra.mxu0 0.0
    %1851 = vmatpush.msra.mxu0 0.0
    %1852 = vmatpush.msra.mxu0 0.0
    %1853 = vmatpush.msra.mxu0 0.0
    %1854 = vmatpush.msra.mxu0 0.0
    %1855 = vmatpush.msra.mxu0 0.0
    %1856 = vmatpush.msra.mxu0 0.0
    %1857 = vmatpush.msra.mxu0 0.0
    %1858 = vmatpush.msra.mxu0 0.0
    %1859 = vmatpush.msra.mxu0 %v87
    %1860 = vmatpush.msra.mxu0 %v83
    %1861 = vmatmul.f32.gmra.mxu0 %v1771
    %v1862 = vpop.f32.mrf.mxu0
    %v1863 = vadd.f32 %v127, %v1862
    %1864 = vmatmul.f32.gmra.mxu0 %v1774
    %v1865 = vpop.f32.mrf.mxu0
    %v1866 = vadd.f32 %v127, %v1865
    %1867 = vdwg.mxu0
    %v1870 = vunpack.c.l.b16 %v1762
    %v1871 = vunpack.c.l.b16 %v1763
    %v1872 = vpack.c.b16 %v1871, %v1870
    %1874 = vmatpush.bf16.msra.mxu0 %v355
    %1875 = vmatpush.bf16.msra.mxu0 %v351
    %1876 = vmatpush.bf16.msra.mxu0 %v347
    %1877 = vmatpush.bf16.msra.mxu0 %v343
    %1878 = vmatpush.bf16.msra.mxu0 %v339
    %1879 = vmatpush.bf16.msra.mxu0 %v335
    %1880 = vmatpush.bf16.msra.mxu0 %v331
    %1881 = vmatpush.bf16.msra.mxu0 %v327
    %1882 = vmatmul.bf16.gmra.mxu0 %v1872
    %v1883 = vpop.f32.mrf.mxu0
    %v1884 = vadd.f32 0.0, %v1883
    %v1885 = vpop.f32.mrf.mxu0
    %v1886 = vadd.f32 0.0, %v1885
    %1887 = vdwg.mxu0
    %1888 = vmatpush.bf16.msra.mxu0 %v356
    %1889 = vmatpush.bf16.msra.mxu0 %v352
    %1890 = vmatpush.bf16.msra.mxu0 %v348
    %1891 = vmatpush.bf16.msra.mxu0 %v344
    %1892 = vmatpush.bf16.msra.mxu0 %v340
    %1893 = vmatpush.bf16.msra.mxu0 %v336
    %1894 = vmatpush.bf16.msra.mxu0 %v332
    %1895 = vmatpush.bf16.msra.mxu0 %v328
    %1896 = vmatmul.bf16.gmra.mxu0 %v1872
    %v1897 = vpop.f32.mrf.mxu0
    %v1898 = vadd.f32 0.0, %v1897
    %v1899 = vpop.f32.mrf.mxu0
    %v1900 = vadd.f32 0.0, %v1899
    %1901 = vdwg.mxu0
    %1902 = vmatpush.bf16.msra.mxu0 %v357
    %1903 = vmatpush.bf16.msra.mxu0 %v353
    %1904 = vmatpush.bf16.msra.mxu0 %v349
    %1905 = vmatpush.bf16.msra.mxu0 %v345
    %1906 = vmatpush.bf16.msra.mxu0 %v341
    %1907 = vmatpush.bf16.msra.mxu0 %v337
    %1908 = vmatpush.bf16.msra.mxu0 %v333
    %1909 = vmatpush.bf16.msra.mxu0 %v329
    %1910 = vmatmul.bf16.gmra.mxu0 %v1872
    %v1911 = vpop.f32.mrf.mxu0
    %v1912 = vadd.f32 0.0, %v1911
    %v1913 = vpop.f32.mrf.mxu0
    %v1914 = vadd.f32 0.0, %v1913
    %1915 = vdwg.mxu0
    %1916 = vmatpush.bf16.msra.mxu0 %v358
    %1917 = vmatpush.bf16.msra.mxu0 %v354
    %1918 = vmatpush.bf16.msra.mxu0 %v350
    %1919 = vmatpush.bf16.msra.mxu0 %v346
    %1920 = vmatpush.bf16.msra.mxu0 %v342
    %1921 = vmatpush.bf16.msra.mxu0 %v338
    %1922 = vmatpush.bf16.msra.mxu0 %v334
    %1923 = vmatpush.bf16.msra.mxu0 %v330
    %1924 = vmatmul.bf16.gmra.mxu0 %v1872
    %v1925 = vpop.f32.mrf.mxu0
    %v1926 = vadd.f32 0.0, %v1925
    %v1927 = vpop.f32.mrf.mxu0
    %v1928 = vadd.f32 0.0, %v1927
    %1929 = vdwg.mxu0
    %v1930 = vadd.f32 %v1794, %v1884
    %v1931 = vadd.f32 %v1817, %v1898
    %v1932 = vadd.f32 %v1840, %v1912
    %v1933 = vadd.f32 %v1863, %v1926
    %v1934 = vadd.f32 %v1797, %v1886
    %v1935 = vadd.f32 %v1820, %v1900
    %v1936 = vadd.f32 %v1843, %v1914
    %v1937 = vadd.f32 %v1866, %v1928
    %v1938 = vmul.f32 %v1930, 0.5
    %v1939 = vmul.f32 %v1934, 0.5
    %v1940 = vtanh.pop %v1938
    %v1941 = vtanh.pop %v1939
    %v1942 = vmul.f32 %v1940, 0.5
    %v1943 = vmul.f32 %v1941, 0.5
    %v1944 = vadd.f32 %v1942, 0.5
    %v1945 = vadd.f32 %v1943, 0.5
    %v1946 = vmul.f32 %v1931, 0.5
    %v1947 = vmul.f32 %v1935, 0.5
    %v1948 = vtanh.pop %v1946
    %v1949 = vtanh.pop %v1947
    %v1950 = vmul.f32 %v1948, 0.5
    %v1951 = vmul.f32 %v1949, 0.5
    %v1952 = vadd.f32 %v1950, 0.5
    %v1953 = vadd.f32 %v1951, 0.5
    %v1954 = vtanh.pop %v1932
    %v1955 = vtanh.pop %v1936
    %v1956 = vmul.f32 %v1933, 0.5
    %v1957 = vmul.f32 %v1937, 0.5
    %v1958 = vtanh.pop %v1956
    %v1959 = vtanh.pop %v1957
    %v1960 = vmul.f32 %v1958, 0.5
    %v1961 = vmul.f32 %v1959, 0.5
    %v1962 = vadd.f32 %v1960, 0.5
    %v1963 = vadd.f32 %v1961, 0.5
    %v1964 = vmul.f32 %v1952, %v1756
    %v1965 = vmul.f32 %v1953, %v1757
    %v1966 = vmul.f32 %v1944, %v1954
    %v1967 = vmul.f32 %v1945, %v1955
    %v1968 = vadd.f32 %v1964, %v1966
    %v1969 = vadd.f32 %v1965, %v1967
    %v1970 = vtanh.pop %v1968
    %v1971 = vtanh.pop %v1969
    %v1972 = vmul.f32 %v1962, %v1970
    %v1973 = vmul.f32 %v1963, %v1971
    %v1974 = vpack.c.bf16 %v1972, %v1972
    %v1975 = vpack.c.bf16 %v1973, %v1973
    %s1976 = scalar_lea.vmem [#allocation10], 56
    %1977 = vst [vmem:[%s1976] sm:$0xf] %v1974
    %1978 = vst [vmem:[%s1976 + $0x4] sm:$0xf] %v1975
    // Predicated region
    $region34: #{tpu_custom_call.1} parent=1 // pred_check
      _
    $region35: #{tpu_custom_call.1} parent=1 // pred_check_branch
      %1980 = sbr.rel (0) target = $region37
    $region36: #{tpu_custom_call.1} parent=1 // pred_region
      %1982 = vsyncadd [#allocation4], 0
      %s1983 = sshll.u32 [#allocation10], 4
      %s1984 = int_to_ptr.vmem [resolvable:$true] %s1983
      %s1985 = sshll.u32 %s4, 4
      %s1986 = int_to_ptr.hbm [resolvable:$true] %s1985
      %1991 = dma.vmem_to_hbm [thread:$0]  %s1984, 1024, %s1986, [#allocation4], 64, 64, 4
    $region37: #{tpu_custom_call.1} parent=1 // pred_fallthru
      _
    // Predicated region
    $region38: #{tpu_custom_call.1} parent=1 // pred_check
      _
    $region39: #{tpu_custom_call.1} parent=1 // pred_check_branch
      %1993 = sbr.rel (0) target = $region41
    $region40: #{tpu_custom_call.1} parent=1 // pred_region
      %1995 = dma.done [#allocation4], 1024
    $region41: #{tpu_custom_call.1} parent=1 // pred_fallthru
      _
    %1996 = vsyncpa [#allocation3], 1
    %1997 = vsyncpa [#allocation6], 1
    %1998 = vsyncpa [#allocation9], 1
    %1999 = vsyncpa [#allocation4], 1

</llo_original>
